<compile_context>
chip_gen: v7x
topology: tpu7x:2x2x1
jax: 0.10.0
libtpu: 0.0.40
codegen_flags: <defaults>
</compile_context>

<pallas_src>
import math
import functools
import numpy as np

import jax
import jax.numpy as jnp
from jax.experimental import pallas as pl
from jax.experimental.pallas import tpu as pltpu

_TILE_N = 512        # output lanes per re/im half (weight block is 2*_TILE_N lanes wide)
_MAX_TILE_K = 4096   # K (= H*W) tile size; bounds VMEM for large images
_TILE_M = 128        # max rows (B*C) per block


def _round_up(x, m):
    return int(-(-x // m) * m)


# ----------------------------------------------------------------------------------
# Host-side (deterministic) construction of the steerable-pyramid linear operators.
# ----------------------------------------------------------------------------------
def _rcos_fn(width=1.0, position=0.0, values=(0.0, 1.0)):
    sz = 256
    X = np.pi * np.arange(-sz - 1, 2) / (2 * sz)
    Y = values[0] + (values[1] - values[0]) * np.cos(X) ** 2
    Y[0] = Y[1]
    Y[sz + 2] = Y[sz + 1]
    X = position + (2 * width / np.pi) * (X + np.pi / 4)
    return X, Y


def _point_op(im, Y, X):
    return np.interp(im.ravel(), X, Y).reshape(im.shape)


def _steerable_pyramid_operators(H, W, n_ori, n_scale, is_complex=True, tight_frame=True):
    """Exact linear operators of the frequency-domain steerable pyramid, obtained by
    pushing the identity basis through the (linear) analysis transform."""
    norm = "ortho" if tight_frame else "backward"
    order = n_ori - 1
    hw = H * W
    basis = np.eye(hw, dtype=np.float64).reshape(hw, H, W)

    dims = np.array([H, W])
    ctr = np.ceil((dims + 0.5) / 2).astype(int)
    xramp, yramp = np.meshgrid(
        (np.arange(1, W + 1) - ctr[1]) / (W / 2.0),
        (np.arange(1, H + 1) - ctr[0]) / (H / 2.0),
    )
    angle = np.arctan2(yramp, xramp)
    log_rad = np.sqrt(xramp ** 2 + yramp ** 2)
    log_rad[ctr[0] - 1, ctr[1] - 1] = log_rad[ctr[0] - 1, ctr[1] - 2]
    log_rad = np.log2(log_rad)

    Xrcos, Yrcos = _rcos_fn(1.0, -0.5, (0.0, 1.0))
    Yrcos = np.sqrt(Yrcos)
    YIrcos = np.sqrt(np.clip(1.0 - Yrcos ** 2, 0.0, None))

    imdft = np.fft.fftshift(np.fft.fft2(basis, norm=norm), axes=(-2, -1))

    hi0mask = _point_op(log_rad, Yrcos, Xrcos)
    lo0mask = _point_op(log_rad, YIrcos, Xrcos)

    hi0 = np.fft.ifft2(np.fft.ifftshift(imdft * hi0mask, axes=(-2, -1)), norm=norm).real
    ops = {"residual_highpass": hi0.reshape(hw, hw)}

    lodft = imdft * lo0mask

    lutsize = 1024
    Xcosn = np.pi * np.arange(-(2 * lutsize + 1), lutsize + 2) / lutsize
    const = (2.0 ** (2 * order)) * (math.factorial(order) ** 2) / (
        n_ori * math.factorial(2 * order))
    if is_complex:
        alpha = (Xcosn + np.pi) % (2 * np.pi) - np.pi
        Ycosn = (2.0 * np.sqrt(const) * (np.cos(Xcosn) ** order)
                 * (np.abs(alpha) < np.pi / 2).astype(np.float64))
    else:
        Ycosn = np.sqrt(const) * (np.cos(Xcosn) ** order)

    band_shapes = {}
    Xr = Xrcos.copy()
    for s in range(n_scale):
        Xr = Xr - np.log2(2.0)
        himask = _point_op(log_rad, Yrcos, Xr)
        hs, ws = lodft.shape[-2:]
        band_shapes[s] = (hs, ws)
        for b in range(n_ori):
            anglemask = _point_op(angle, Ycosn, Xcosn + np.pi * b / n_ori)
            banddft = ((-1j) ** order) * lodft * anglemask * himask
            band = np.fft.ifft2(np.fft.ifftshift(banddft, axes=(-2, -1)), norm=norm)
            if not is_complex:
                band = band.real
            ops[(s, b)] = band.reshape(hw, hs * ws)
        # downsample = crop the centered DFT to the central half
        cdims = np.array(lodft.shape[-2:])
        cctr = np.ceil((cdims + 0.5) / 2).astype(int)
        lodims = np.ceil((cdims - 0.5) / 2).astype(int)
        loctr = np.ceil((lodims + 0.5) / 2).astype(int)
        lostart = cctr - loctr
        loend = lostart + lodims
        log_rad = log_rad[lostart[0]:loend[0], lostart[1]:loend[1]]
        angle = angle[lostart[0]:loend[0], lostart[1]:loend[1]]
        lodft = lodft[..., lostart[0]:loend[0], lostart[1]:loend[1]]
        lomask = _point_op(log_rad, YIrcos, Xr)
        lodft = lodft * lomask
        # TODO(synk): plenoptic's tight_frame downsample applies an extra /2 rescale of
        # lodft here; we keep the self-consistent 'ortho' FFT normalization instead.

    lo0 = np.fft.ifft2(np.fft.ifftshift(lodft, axes=(-2, -1)), norm=norm).real
    lh, lw = lodft.shape[-2:]
    ops["residual_lowpass"] = lo0.reshape(hw, lh * lw)
    band_shapes["lowpass"] = (lh, lw)
    return ops, band_shapes


# ----------------------------------------------------------------------------------
# In-kernel elementwise math (rectangular -> polar).  Exact divides: the epilogue runs
# once per N tile so it is fully amortized over the K loop.
# ----------------------------------------------------------------------------------
def _atan(z):
    """float32 atan (Cephes atanf) built from mul/add/select + exact divides."""
    sgn = jnp.where(z >= 0.0, jnp.float32(1.0), jnp.float32(-1.0))
    x = jnp.abs(z)
    big = x > 2.414213562373095   # tan(3*pi/8)
    mid = x > 0.4142135623730951  # tan(pi/8)
    x_big = -1.0 / jnp.where(big, x, jnp.float32(1.0))
    x_mid = (x - 1.0) / (x + 1.0)
    xr = jnp.where(big, x_big, jnp.where(mid, x_mid, x))
    yoff = jnp.where(big, jnp.float32(np.pi / 2),
                     jnp.where(mid, jnp.float32(np.pi / 4), jnp.float32(0.0)))
    z2 = xr * xr
    p = ((((8.05374449538e-2 * z2 - 1.38776856032e-1) * z2 + 1.99777106478e-1) * z2
          - 3.33329491539e-1) * z2 * xr + xr)
    return sgn * (yoff + p)


def _atan2(y, x):
    safe_x = jnp.where(x == 0.0, jnp.float32(1.0), x)
    base = _atan(y / safe_x)
    w = jnp.where(x < 0.0,
                  jnp.where(y >= 0.0, jnp.float32(np.pi), jnp.float32(-np.pi)),
                  jnp.float32(0.0))
    res = base + w
    res = jnp.where(
        x == 0.0,
        jnp.where(y > 0.0, jnp.float32(np.pi / 2),
                  jnp.where(y < 0.0, jnp.float32(-np.pi / 2), jnp.float32(0.0))),
        res)
    return res


# ----------------------------------------------------------------------------------
# The fused Pallas kernel:  grid = (M tiles, N tiles, K tiles)  [par, par, arbitrary]
#   * weights: int8, one [re|im] (band tiles) or [res|res] (residual tiles) block/step
#   * dequant scale + polar factorization only in the k==last epilogue
# ----------------------------------------------------------------------------------
def _pyramid_kernel(x_ref, w_ref, s_ref, amp_ref, ph_ref, acc_ref, *, n_polar_tiles):
    j = pl.program_id(1)
    k = pl.program_id(2)

    @pl.when(k == 0)
    def _():
        acc_ref[...] = jnp.zeros_like(acc_ref)

    # int8 -> bf16 upcast happens in VMEM; the MXU only ever sees bf16 (portable to
    # v7x which has no integer MXU).  HBM weight traffic stays int8.
    acc_ref[...] += jnp.dot(x_ref[...], w_ref[...].astype(jnp.bfloat16),
                            preferred_element_type=jnp.float32)

    @pl.when(k == pl.num_programs(2) - 1)
    def _():
        tn = amp_ref.shape[-1]
        acc = acc_ref[...] * s_ref[...]          # per-output-column dequant scale
        re = acc[:, :tn]
        im = acc[:, tn:]

        @pl.when(j < n_polar_tiles)              # oriented band tile -> polar factorize
        def _():
            amp_ref[...] = jnp.sqrt(re * re + im * im)   # energy (amplitude)
            ph_ref[...] = _atan2(im, re)                 # state  (phase)

        @pl.when(j >= n_polar_tiles)             # residual pair tile -> pass through
        def _():
            amp_ref[...] = re
            ph_ref[...] = im


def _pad_k(x, w, max_tile_k):
    """Pick a K tile and zero-pad x (cols) / w (rows) so hw is a multiple of it."""
    hw = x.shape[1]
    if hw <= max_tile_k:
        return x, w, hw
    tile_k = max_tile_k
    hw_pad = _round_up(hw, tile_k)
    if hw_pad != hw:
        x = jnp.pad(x, ((0, 0), (0, hw_pad - hw)))
        w = jnp.pad(w, ((0, 0), (0, 0)) if False else ((0, hw_pad - hw), (0, 0)))
    return x, w, tile_k


def _fused_pyramid_matmul(x, w_q, w_scale, n_polar_tiles, *,
                          tile_n=_TILE_N, max_tile_k=_MAX_TILE_K):
    rows = x.shape[0]                      # already padded to a multiple of tile_m
    tile_m = min(rows, _TILE_M)
    m_tiles = rows // tile_m
    two_n = w_q.shape[1]                   # 2 * tile_n * n_grid_tiles
    n_grid_tiles = two_n // (2 * tile_n)
    x, w_q, tile_k = _pad_k(x, w_q, max_tile_k)
    hw_pad = x.shape[1]
    k_tiles = hw_pad // tile_k
    n_out = n_grid_tiles * tile_n

    cost = pl.CostEstimate(
        flops=2 * rows * hw_pad * two_n,
        transcendentals=3 * rows * n_out,
        bytes_accessed=(hw_pad * two_n * w_q.dtype.itemsize
                        + n_grid_tiles * rows * hw_pad * x.dtype.itemsize
                        + 2 * rows * n_out * 4))

    kernel = functools.partial(_pyramid_kernel, n_polar_tiles=n_polar_tiles)
    amp, ph = pl.pallas_call(
        kernel,
        out_shape=(jax.ShapeDtypeStruct((rows, n_out), jnp.float32),
                   jax.ShapeDtypeStruct((rows, n_out), jnp.float32)),
        grid=(m_tiles, n_grid_tiles, k_tiles),
        in_specs=[
            pl.BlockSpec((tile_m, tile_k), lambda m, j, k: (m, k)),
            pl.BlockSpec((tile_k, 2 * tile_n), lambda m, j, k: (k, j)),
            pl.BlockSpec((1, 2 * tile_n), lambda m, j, k: (0, j)),
        ],
        out_specs=(
            pl.BlockSpec((tile_m, tile_n), lambda m, j, k: (m, j)),
            pl.BlockSpec((tile_m, tile_n), lambda m, j, k: (m, j)),
        ),
        scratch_shapes=[pltpu.VMEM((tile_m, 2 * tile_n), jnp.float32)],
        compiler_params=pltpu.CompilerParams(
            dimension_semantics=("parallel", "parallel", "arbitrary"),
            vmem_limit_bytes=48 * 1024 * 1024),   # fits v7x's 64 MiB/TC with headroom
        cost_estimate=cost,
    )(x, w_q, w_scale)
    return amp, ph


# ----------------------------------------------------------------------------------
# FactorizedPyramid (forward == analysis) wrapper
# ----------------------------------------------------------------------------------
class FactorizedPyramidPallas:
    def __init__(self, image_size, n_ori=4, n_scale="auto",
                 downsample_dict=True, is_complex=True, tight_frame=True,
                 weight_quant="int8"):
        # TODO(synk): real-valued (local_gain_control) and non-downsampled tensor paths
        # of the original module are not implemented here; synthesis is not implemented.
        assert is_complex and downsample_dict
        if isinstance(image_size, int):
            H, W = image_size, image_size
        else:
            H, W = int(image_size[0]), int(image_size[1])
        if n_scale == "auto":
            n_scale = int(np.floor(np.log2(min(H, W))) - 2)
        self.H, self.W = H, W
        self.n_ori, self.n_scale = n_ori, n_scale
        self.is_complex = is_complex
        self.downsample_dict = downsample_dict

        ops, shapes = _steerable_pyramid_operators(H, W, n_ori, n_scale,
                                                   is_complex=is_complex,
                                                   tight_frame=tight_frame)
        self.band_shapes = shapes
        hw = H * W
        tn = _TILE_N

        # ---- oriented-band operators: per-scale concat, pad to a multiple of tile_n --
        wr_blocks, wi_blocks = [], []
        self.scale_offsets = {}
        col = 0
        for s in range(n_scale):
            mats = [ops[(s, b)] for b in range(n_ori)]
            wr = np.concatenate([m.real for m in mats], axis=1)
            wi = np.concatenate([m.imag for m in mats], axis=1)
            n_out = wr.shape[1]
            n_pad = _round_up(n_out, tn)
            wr = np.pad(wr, ((0, 0), (0, n_pad - n_out)))
            wi = np.pad(wi, ((0, 0), (0, n_pad - n_out)))
            self.scale_offsets[s] = (col, n_out)
            col += n_pad
            wr_blocks.append(wr)
            wi_blocks.append(wi)
        WR = np.concatenate(wr_blocks, axis=1)
        WI = np.concatenate(wi_blocks, axis=1)
        self.n_polar = WR.shape[1]
        self.n_polar_tiles = self.n_polar // tn

        # ---- residual operators (real): pack PAIRS of tiles into one 2*tn block ------
        w_res = np.concatenate(
            [ops["residual_highpass"], ops["residual_lowpass"]], axis=1)
        self.n_res = w_res.shape[1]
        n_res_pad = _round_up(self.n_res, 2 * tn)
        # keep the TOTAL number of 2*tn grid tiles EVEN so v7x's two TensorCores get
        # equal work along the "parallel" N axis (no-op cost on v5e/v6e).
        if (self.n_polar_tiles + n_res_pad // (2 * tn)) % 2 == 1:
            n_res_pad += 2 * tn
        w_res = np.pad(w_res, ((0, 0), (0, n_res_pad - self.n_res)))
        self.n_res_pairs = n_res_pad // (2 * tn)
        n_grid_tiles = self.n_polar_tiles + self.n_res_pairs

        # ---- fuse everything into ONE weight matrix: one 2*tn block per grid tile ----
        #   j <  n_polar_tiles : [ WR tile | WI tile ]   -> polar epilogue
        #   j >= n_polar_tiles : [ res tile | res tile ] -> pass-through epilogue
        polar_blocks = np.concatenate(
            [WR.reshape(hw, self.n_polar_tiles, tn),
             WI.reshape(hw, self.n_polar_tiles, tn)], axis=2)
        res_blocks = w_res.reshape(hw, self.n_res_pairs, 2 * tn)
        W_fused = np.concatenate([polar_blocks, res_blocks], axis=1).reshape(hw, -1)

        # ---- weight quantization: int8 + per-output-column f32 scales ---------------
        # TODO(synk): an fp8 (e4m3) variant would give the same traffic cut on v7x.
        if weight_quant == "int8":
            absmax = np.abs(W_fused).max(axis=0)
            scale = np.where(absmax > 0.0, absmax / 127.0, 1.0).astype(np.float32)
            w_q_np = np.clip(
                np.round(W_fused / scale.astype(np.float64)[None, :]),
                -127, 127).astype(np.int8)
            self.w_q = jnp.asarray(w_q_np)
            w_deq = w_q_np.astype(np.float64) * scale.astype(np.float64)[None, :]
        else:  # plain bf16 weight streaming
            scale = np.ones(W_fused.shape[1], dtype=np.float32)
            self.w_q = jnp.asarray(W_fused, dtype=jnp.bfloat16)
            w_deq = np.asarray(self.w_q.astype(jnp.float32), dtype=np.float64)
        self.w_scale = jnp.asarray(scale.reshape(1, -1), dtype=jnp.float32)

        # float64 copies of the *quantized* operators, de-interleaved back to the
        # original column order -- used only by the self-check in __main__.
        w_deq_blocks = w_deq.reshape(hw, n_grid_tiles, 2, tn)
        self._wr_ref = w_deq_blocks[:, :self.n_polar_tiles, 0, :].reshape(hw, self.n_polar)
        self._wi_ref = w_deq_blocks[:, :self.n_polar_tiles, 1, :].reshape(hw, self.n_polar)
        self._w_res_ref = (w_deq_blocks[:, self.n_polar_tiles:, :, :]
                           .reshape(hw, self.n_res_pairs * 2 * tn)[:, :self.n_res])

    def forward(self, x):
        # analysis(x) -> (energy, state); residuals are stored in amplitude (energy).
        B, C, H, W = x.shape
        assert (H, W) == (self.H, self.W)
        rows = B * C                       # fold channels into batch (docstring "hack")
        hw = H * W
        if rows <= _TILE_M:
            rows_pad = max(_round_up(rows, 8), 8)
        else:
            rows_pad = _round_up(rows, _TILE_M)
        xf = jnp.asarray(x, jnp.float32).reshape(rows, hw).astype(jnp.bfloat16)
        x_pad = jnp.zeros((rows_pad, hw), jnp.bfloat16).at[:rows].set(xf)

        amp, ph = _fused_pyramid_matmul(x_pad, self.w_q, self.w_scale,
                                        self.n_polar_tiles)

        energy, state = {}, {}
        for s in range(self.n_scale):
            off, n_out_s = self.scale_offsets[s]
            hs, ws = self.band_shapes[s]
            a = amp[:rows, off:off + n_out_s].reshape(B, C, self.n_ori, hs, ws)
            p = ph[:rows, off:off + n_out_s].reshape(B, C, self.n_ori, hs, ws)
            for b in range(self.n_ori):
                energy[(s, b)] = a[:, :, b]
                state[(s, b)] = p[:, :, b]

        # residual pair tiles: first half of each pair landed in amp, second half in ph
        tn = _TILE_N
        ra = amp[:rows, self.n_polar:].reshape(rows, self.n_res_pairs, tn)
        rp = ph[:rows, self.n_polar:].reshape(rows, self.n_res_pairs, tn)
        res = jnp.stack([ra, rp], axis=2).reshape(rows, self.n_res_pairs * 2 * tn)
        res = res[:, :self.n_res]
        lh, lw = self.band_shapes["lowpass"]
        energy["residual_highpass"] = res[:, :hw].reshape(B, C, H, W)
        energy["residual_lowpass"] = res[:, hw:hw + lh * lw].reshape(B, C, lh, lw)
        return energy, state

    __call__ = forward


if __name__ == "__main__":
    B, C, H, W = 2, 4, 16, 16   # channels are folded into the batch dim inside forward
    key = jax.random.PRNGKey(0)
    x = jax.random.normal(key, (B, C, H, W), dtype=jnp.float32)

    model = FactorizedPyramidPallas((H, W))
    energy, state = model(x)
    jax.block_until_ready(list(energy.values()) + list(state.values()))

    # Numerical sanity check vs a host-side float64 reference built from the SAME
    # int8-quantized (dequantized) operators and the same bf16-rounded input.
    rows, hw = B * C, H * W
    xq = np.asarray(
        jnp.asarray(x, jnp.float32).reshape(rows, hw)
        .astype(jnp.bfloat16).astype(jnp.float32), dtype=np.float64)

    ok = True
    for s in range(model.n_scale):
        off, n_out_s = model.scale_offsets[s]
        hs, ws = model.band_shapes[s]
        re = xq @ model._wr_ref[:, off:off + n_out_s]
        im = xq @ model._wi_ref[:, off:off + n_out_s]
        z_ref = re + 1j * im
        amp_k = np.concatenate(
            [np.asarray(energy[(s, b)]).reshape(rows, hs * ws)
             for b in range(model.n_ori)], axis=1)
        ph_k = np.concatenate(
            [np.asarray(state[(s, b)]).reshape(rows, hs * ws)
             for b in range(model.n_ori)], axis=1)
        z_k = amp_k * np.exp(1j * ph_k)
        ok &= np.allclose(amp_k, np.abs(z_ref), atol=1e-3, rtol=1e-3)
        ok &= np.allclose(z_k, z_ref, atol=5e-3, rtol=5e-3)

    res_ref = xq @ model._w_res_ref
    lh, lw = model.band_shapes["lowpass"]
    ok &= np.allclose(np.asarray(energy["residual_highpass"]).reshape(rows, hw),
                      res_ref[:, :hw], atol=1e-3, rtol=1e-3)
    ok &= np.allclose(np.asarray(energy["residual_lowpass"]).reshape(rows, lh * lw),
                      res_ref[:, hw:hw + lh * lw], atol=1e-3, rtol=1e-3)
    assert ok, "Pallas FactorizedPyramid output mismatch vs reference"

    print("KERNEL_OK")
</pallas_src>

<mosaic_0001>
module attributes {stable_mosaic.version = 11 : i64} {
  func.func @_pyramid_kernel(%arg0: i32, %arg1: i32, %arg2: i32, %arg3: memref<8x256xbf16, #tpu.memory_space<vmem>>, %arg4: memref<256x1024xi8, #tpu.memory_space<vmem>>, %arg5: memref<1x1024xf32, #tpu.memory_space<vmem>>, %arg6: memref<8x512xf32, #tpu.memory_space<vmem>>, %arg7: memref<8x512xf32, #tpu.memory_space<vmem>>, %arg8: memref<8x1024xf32, #tpu.memory_space<vmem>>) attributes {dimension_semantics = [#tpu.dimension_semantics<parallel>, #tpu.dimension_semantics<parallel>, #tpu.dimension_semantics<arbitrary>], iteration_bounds = array<i64: 1, 4, 1>, scalar_prefetch = 0 : i64, scratch_operands = 1 : i64, tpu.core_type = #tpu.core_type<tc>, window_params = [{transform_indices = @transform_0, window_bounds = array<i64: 8, 256>}, {transform_indices = @transform_1, window_bounds = array<i64: 256, 1024>}, {transform_indices = @transform_2, window_bounds = array<i64: 1, 1024>}, {transform_indices = @transform_3, window_bounds = array<i64: 8, 512>}, {transform_indices = @transform_4, window_bounds = array<i64: 8, 512>}]} {
    %c0_i32 = arith.constant 0 : i32
    %0 = arith.cmpi eq, %arg2, %c0_i32 : i32
    %1 = arith.extui %0 : i1 to i32
    %c0_i32_0 = arith.constant 0 : i32
    %2 = arith.cmpi ne, %1, %c0_i32_0 : i32
    scf.if %2 {
      %cst_10 = arith.constant 0.000000e+00 : f32
      %13 = vector.broadcast %cst_10 : f32 to vector<8x1024xf32>
      %c0_11 = arith.constant 0 : index
      %c0_12 = arith.constant 0 : index
      %14 = vector.load %arg8[%c0_11, %c0_12] : memref<8x1024xf32, #tpu.memory_space<vmem>>, vector<8x1024xf32>
      tpu.vector_store %arg8[%c0_11, %c0_12], %13 {strides = array<i32>} : memref<8x1024xf32, #tpu.memory_space<vmem>>, vector<8x1024xf32>,
    } else {
    }
    %c0 = arith.constant 0 : index
    %c0_1 = arith.constant 0 : index
    %3 = vector.load %arg8[%c0, %c0_1] : memref<8x1024xf32, #tpu.memory_space<vmem>>, vector<8x1024xf32>
    %c0_2 = arith.constant 0 : index
    %c0_3 = arith.constant 0 : index
    %4 = vector.load %arg3[%c0_2, %c0_3] : memref<8x256xbf16, #tpu.memory_space<vmem>>, vector<8x256xbf16>
    %c0_4 = arith.constant 0 : index
    %c0_5 = arith.constant 0 : index
    %5 = vector.load %arg4[%c0_4, %c0_5] : memref<256x1024xi8, #tpu.memory_space<vmem>>, vector<256x1024xi8>
    %6 = arith.sitofp %5 : vector<256x1024xi8> to vector<256x1024xbf16>
    %cst = arith.constant dense<0.000000e+00> : vector<8x1024xf32>
    %7 = tpu.matmul %4, %6, %cst {dimension_numbers = #tpu.dot_dimension_numbers<[1], [0], [0], [1], [0, 0, 1, 1], [], []>} : vector<8x256xbf16>, vector<256x1024xbf16>, vector<8x1024xf32> -> vector<8x1024xf32>
    %8 = arith.addf %3, %7 : vector<8x1024xf32>
    %c0_6 = arith.constant 0 : index
    %c0_7 = arith.constant 0 : index
    %9 = vector.load %arg8[%c0_6, %c0_7] : memref<8x1024xf32, #tpu.memory_space<vmem>>, vector<8x1024xf32>
    tpu.vector_store %arg8[%c0_6, %c0_7], %8 {strides = array<i32>} : memref<8x1024xf32, #tpu.memory_space<vmem>>, vector<8x1024xf32>,
    %c0_i32_8 = arith.constant 0 : i32
    %10 = arith.cmpi eq, %arg2, %c0_i32_8 : i32
    %11 = arith.extui %10 : i1 to i32
    %c0_i32_9 = arith.constant 0 : i32
    %12 = arith.cmpi ne, %11, %c0_i32_9 : i32
    scf.if %12 {
      %c0_10 = arith.constant 0 : index
      %c0_11 = arith.constant 0 : index
      %13 = vector.load %arg8[%c0_10, %c0_11] : memref<8x1024xf32, #tpu.memory_space<vmem>>, vector<8x1024xf32>
      %c0_12 = arith.constant 0 : index
      %c0_13 = arith.constant 0 : index
      %14 = vector.load %arg5[%c0_12, %c0_13] : memref<1x1024xf32, #tpu.memory_space<vmem>>, vector<1x1024xf32>
      %15 = vector.broadcast %14 : vector<1x1024xf32> to vector<8x1024xf32>
      %16 = arith.mulf %13, %15 : vector<8x1024xf32>
      %17 = vector.extract_strided_slice %16 {offsets = [0, 0], sizes = [8, 512], strides = [1, 1]} : vector<8x1024xf32> to vector<8x512xf32>
      %18 = vector.extract_strided_slice %16 {offsets = [0, 512], sizes = [8, 512], strides = [1, 1]} : vector<8x1024xf32> to vector<8x512xf32>
      %c3_i32 = arith.constant 3 : i32
      %19 = arith.cmpi slt, %arg1, %c3_i32 : i32
      %20 = arith.extui %19 : i1 to i32
      %c0_i32_14 = arith.constant 0 : i32
      %21 = arith.cmpi ne, %20, %c0_i32_14 : i32
      scf.if %21 {
        %25 = arith.mulf %17, %17 : vector<8x512xf32>
        %26 = arith.mulf %18, %18 : vector<8x512xf32>
        %27 = arith.addf %25, %26 : vector<8x512xf32>
        %28 = math.sqrt %27 : vector<8x512xf32>
        %c0_17 = arith.constant 0 : index
        %c0_18 = arith.constant 0 : index
        %29 = vector.load %arg6[%c0_17, %c0_18] : memref<8x512xf32, #tpu.memory_space<vmem>>, vector<8x512xf32>
        tpu.vector_store %arg6[%c0_17, %c0_18], %28 {strides = array<i32>} : memref<8x512xf32, #tpu.memory_space<vmem>>, vector<8x512xf32>,
        %cst_19 = arith.constant 0.000000e+00 : f32
        %30 = vector.broadcast %cst_19 : f32 to vector<8x512xf32>
        %31 = arith.cmpf oeq, %17, %30 : vector<8x512xf32>
        %cst_20 = arith.constant 1.000000e+00 : f32
        %32 = vector.broadcast %cst_20 : f32 to vector<8x512xf32>
        %33 = arith.select %31, %32, %17 : vector<8x512xi1>, vector<8x512xf32>
        %34 = arith.divf %18, %33 : vector<8x512xf32>
        %cst_21 = arith.constant 0.000000e+00 : f32
        %35 = vector.broadcast %cst_21 : f32 to vector<8x512xf32>
        %36 = arith.cmpf oge, %34, %35 : vector<8x512xf32>
        %cst_22 = arith.constant 1.000000e+00 : f32
        %cst_23 = arith.constant -1.000000e+00 : f32
        %37 = vector.broadcast %cst_22 : f32 to vector<8x512xf32>
        %38 = vector.broadcast %cst_23 : f32 to vector<8x512xf32>
        %39 = arith.select %36, %37, %38 : vector<8x512xi1>, vector<8x512xf32>
        %40 = math.absf %34 : vector<8x512xf32>
        %cst_24 = arith.constant 2.41421366 : f32
        %41 = vector.broadcast %cst_24 : f32 to vector<8x512xf32>
        %42 = arith.cmpf ogt, %40, %41 : vector<8x512xf32>
        %cst_25 = arith.constant 0.414213568 : f32
        %43 = vector.broadcast %cst_25 : f32 to vector<8x512xf32>
        %44 = arith.cmpf ogt, %40, %43 : vector<8x512xf32>
        %cst_26 = arith.constant 1.000000e+00 : f32
        %45 = vector.broadcast %cst_26 : f32 to vector<8x512xf32>
        %46 = arith.select %42, %40, %45 : vector<8x512xi1>, vector<8x512xf32>
        %cst_27 = arith.constant -1.000000e+00 : f32
        %47 = vector.broadcast %cst_27 : f32 to vector<8x512xf32>
        %48 = arith.divf %47, %46 : vector<8x512xf32>
        %cst_28 = arith.constant 1.000000e+00 : f32
        %49 = vector.broadcast %cst_28 : f32 to vector<8x512xf32>
        %50 = arith.subf %40, %49 : vector<8x512xf32>
        %cst_29 = arith.constant 1.000000e+00 : f32
        %51 = vector.broadcast %cst_29 : f32 to vector<8x512xf32>
        %52 = arith.addf %40, %51 : vector<8x512xf32>
        %53 = arith.divf %50, %52 : vector<8x512xf32>
        %54 = arith.select %44, %53, %40 : vector<8x512xi1>, vector<8x512xf32>
        %55 = arith.select %42, %48, %54 : vector<8x512xi1>, vector<8x512xf32>
        %cst_30 = arith.constant 0.785398185 : f32
        %cst_31 = arith.constant 0.000000e+00 : f32
        %56 = vector.broadcast %cst_30 : f32 to vector<8x512xf32>
        %57 = vector.broadcast %cst_31 : f32 to vector<8x512xf32>
        %58 = arith.select %44, %56, %57 : vector<8x512xi1>, vector<8x512xf32>
        %cst_32 = arith.constant 1.57079637 : f32
        %59 = vector.broadcast %cst_32 : f32 to vector<8x512xf32>
        %60 = arith.select %42, %59, %58 : vector<8x512xi1>, vector<8x512xf32>
        %61 = arith.mulf %55, %55 : vector<8x512xf32>
        %cst_33 = arith.constant 0.0805374458 : f32
        %62 = vector.broadcast %cst_33 : f32 to vector<8x512xf32>
        %63 = arith.mulf %62, %61 : vector<8x512xf32>
        %cst_34 = arith.constant 0.138776854 : f32
        %64 = vector.broadcast %cst_34 : f32 to vector<8x512xf32>
        %65 = arith.subf %63, %64 : vector<8x512xf32>
        %66 = arith.mulf %65, %61 : vector<8x512xf32>
        %cst_35 = arith.constant 0.199777111 : f32
        %67 = vector.broadcast %cst_35 : f32 to vector<8x512xf32>
        %68 = arith.addf %66, %67 : vector<8x512xf32>
        %69 = arith.mulf %68, %61 : vector<8x512xf32>
        %cst_36 = arith.constant 0.333329499 : f32
        %70 = vector.broadcast %cst_36 : f32 to vector<8x512xf32>
        %71 = arith.subf %69, %70 : vector<8x512xf32>
        %72 = arith.mulf %71, %61 : vector<8x512xf32>
        %73 = arith.mulf %72, %55 : vector<8x512xf32>
        %74 = arith.addf %73, %55 : vector<8x512xf32>
        %75 = arith.addf %60, %74 : vector<8x512xf32>
        %76 = arith.mulf %39, %75 : vector<8x512xf32>
        %cst_37 = arith.constant 0.000000e+00 : f32
        %77 = vector.broadcast %cst_37 : f32 to vector<8x512xf32>
        %78 = arith.cmpf olt, %17, %77 : vector<8x512xf32>
        %cst_38 = arith.constant 0.000000e+00 : f32
        %79 = vector.broadcast %cst_38 : f32 to vector<8x512xf32>
        %80 = arith.cmpf oge, %18, %79 : vector<8x512xf32>
        %cst_39 = arith.constant 3.14159274 : f32
        %cst_40 = arith.constant -3.14159274 : f32
        %81 = vector.broadcast %cst_39 : f32 to vector<8x512xf32>
        %82 = vector.broadcast %cst_40 : f32 to vector<8x512xf32>
        %83 = arith.select %80, %81, %82 : vector<8x512xi1>, vector<8x512xf32>
        %cst_41 = arith.constant 0.000000e+00 : f32
        %84 = vector.broadcast %cst_41 : f32 to vector<8x512xf32>
        %85 = arith.select %78, %83, %84 : vector<8x512xi1>, vector<8x512xf32>
        %86 = arith.addf %76, %85 : vector<8x512xf32>
        %cst_42 = arith.constant 0.000000e+00 : f32
        %87 = vector.broadcast %cst_42 : f32 to vector<8x512xf32>
        %88 = arith.cmpf oeq, %17, %87 : vector<8x512xf32>
        %cst_43 = arith.constant 0.000000e+00 : f32
        %89 = vector.broadcast %cst_43 : f32 to vector<8x512xf32>
        %90 = arith.cmpf ogt, %18, %89 : vector<8x512xf32>
        %cst_44 = arith.constant 0.000000e+00 : f32
        %91 = vector.broadcast %cst_44 : f32 to vector<8x512xf32>
        %92 = arith.cmpf olt, %18, %91 : vector<8x512xf32>
        %cst_45 = arith.constant -1.57079637 : f32
        %cst_46 = arith.constant 0.000000e+00 : f32
        %93 = vector.broadcast %cst_45 : f32 to vector<8x512xf32>
        %94 = vector.broadcast %cst_46 : f32 to vector<8x512xf32>
        %95 = arith.select %92, %93, %94 : vector<8x512xi1>, vector<8x512xf32>
        %cst_47 = arith.constant 1.57079637 : f32
        %96 = vector.broadcast %cst_47 : f32 to vector<8x512xf32>
        %97 = arith.select %90, %96, %95 : vector<8x512xi1>, vector<8x512xf32>
        %98 = arith.select %88, %97, %86 : vector<8x512xi1>, vector<8x512xf32>
        %c0_48 = arith.constant 0 : index
        %c0_49 = arith.constant 0 : index
        %99 = vector.load %arg7[%c0_48, %c0_49] : memref<8x512xf32, #tpu.memory_space<vmem>>, vector<8x512xf32>
        tpu.vector_store %arg7[%c0_48, %c0_49], %98 {strides = array<i32>} : memref<8x512xf32, #tpu.memory_space<vmem>>, vector<8x512xf32>,
      } else {
      }
      %c3_i32_15 = arith.constant 3 : i32
      %22 = arith.cmpi sge, %arg1, %c3_i32_15 : i32
      %23 = arith.extui %22 : i1 to i32
      %c0_i32_16 = arith.constant 0 : i32
      %24 = arith.cmpi ne, %23, %c0_i32_16 : i32
      scf.if %24 {
        %c0_17 = arith.constant 0 : index
        %c0_18 = arith.constant 0 : index
        %25 = vector.load %arg6[%c0_17, %c0_18] : memref<8x512xf32, #tpu.memory_space<vmem>>, vector<8x512xf32>
        tpu.vector_store %arg6[%c0_17, %c0_18], %17 {strides = array<i32>} : memref<8x512xf32, #tpu.memory_space<vmem>>, vector<8x512xf32>,
        %c0_19 = arith.constant 0 : index
        %c0_20 = arith.constant 0 : index
        %26 = vector.load %arg7[%c0_19, %c0_20] : memref<8x512xf32, #tpu.memory_space<vmem>>, vector<8x512xf32>
        tpu.vector_store %arg7[%c0_19, %c0_20], %18 {strides = array<i32>} : memref<8x512xf32, #tpu.memory_space<vmem>>, vector<8x512xf32>,
      } else {
      }
    } else {
    }
    return
  }
  func.func @transform_0(%arg0: i32, %arg1: i32, %arg2: i32) -> (i32, i32) {
    %c0_i32 = arith.constant 0 : i32
    return %arg0, %arg2 : i32, i32
  }
  func.func @transform_1(%arg0: i32, %arg1: i32, %arg2: i32) -> (i32, i32) {
    %c0_i32 = arith.constant 0 : i32
    return %arg2, %arg1 : i32, i32
  }
  func.func @transform_2(%arg0: i32, %arg1: i32, %arg2: i32) -> (i32, i32) {
    %c0_i32 = arith.constant 0 : i32
    %c0_i32_0 = arith.constant 0 : i32
    return %c0_i32, %arg1 : i32, i32
  }
  func.func @transform_3(%arg0: i32, %arg1: i32, %arg2: i32) -> (i32, i32) {
    %c0_i32 = arith.constant 0 : i32
    return %arg0, %arg1 : i32, i32
  }
  func.func @transform_4(%arg0: i32, %arg1: i32, %arg2: i32) -> (i32, i32) {
    %c0_i32 = arith.constant 0 : i32
    return %arg0, %arg1 : i32, i32
  }
}

</mosaic_0001>

<llo_original>
// kernel: tpu_custom_call.1
$region0: #{tpu_custom_call.1}
  #allocation0 [shape = 'u32[]', space=smem, size = 0x4, offset = 0x4, fixed_abs, tag = 'smem constant byte address 0x4 - core index']
  #allocation1 [shape = 'u32[144,128]{1,0:T(1,128)}', space=vmem, size = 0x12000, scoped, tag = 'internal scratch']
  #allocation2 [shape = 'f32[8,1024]{1,0:T(8,128)}', space=vmem, size = 0x8000, scoped, tag = 'scratch operand']
  %s0 = inlined_call_operand.hbm [shape: bf16[8,256], index: 0, kind: input, shape index: {}]
  %s1 = inlined_call_operand.hbm [shape: s8[256,4096], index: 1, kind: input, shape index: {}]
  %s2 = inlined_call_operand.hbm [shape: f32[1,4096], index: 2, kind: input, shape index: {}]
  %s3 = inlined_call_operand.hbm [shape: f32[8,2048], index: 3, kind: output, shape index: {0}]
  %s4 = inlined_call_operand.hbm [shape: f32[8,2048], index: 4, kind: output, shape index: {1}]
  %5 = xla_tuple %s3, %s4
  %s6 = sld [smem:[#allocation0]]
  $region81: #{tpu_custom_call.1} parent=0
    _
  %s8 = ssub.s32 1, %s6
  %s9 = scalar_select 0, %s8, %s6
  $region1: #{tpu_custom_call.1} parent=0
    #allocation3 [shape = 'u8[4096]{0}', space=vmem, size = 0x1000, scoped, tag = 'input window, operand 0, single buffered']
    #allocation4 [shape = 's32[2]{0}', space=sflag, size = 0x8, scoped, tag = 'scoped memory for tpu_custom_call.1']
    #allocation5 [shape = 's32[2]{0}', space=sflag, size = 0x8, scoped, tag = 'scoped memory for tpu_custom_call.1']
    #allocation6 [shape = 'u8[524288]{0}', space=vmem, size = 0x80000, scoped, tag = 'input window, operand 1']
    #allocation7 [shape = 's32[2]{0}', space=sflag, size = 0x8, scoped, tag = 'scoped memory for tpu_custom_call.1']
    #allocation8 [shape = 'u8[8192]{0}', space=vmem, size = 0x2000, scoped, tag = 'input window, operand 2']
    #allocation9 [shape = 'u8[32768]{0}', space=vmem, size = 0x8000, scoped, tag = 'output window, operand 0']
    #allocation10 [shape = 'u8[32768]{0}', space=vmem, size = 0x8000, scoped, tag = 'output window, operand 1']
    #allocation11 [shape = 's32[2]{0}', space=sflag, size = 0x8, scoped, tag = 'scoped memory for tpu_custom_call.1']
    %10 = vsyncpa [#allocation4], 0
    %11 = vsyncpa [#allocation7], 0
    %s12 = scalar_lea.sflag [#allocation7], 1
    %13 = vsyncpa %s12, 0
    %14 = vsyncpa [#allocation5], 0
    %s15 = scalar_lea.sflag [#allocation5], 1
    %16 = vsyncpa %s15, 0
    %17 = vsyncpa [#allocation11], 0
    %s18 = scalar_lea.sflag [#allocation11], 1
    %19 = vsyncpa %s18, 0
    loop: start=0, step=1, limit=6
    $region2: #{tpu_custom_call.1} parent=1 // loop_pre_header
      _
    $region3: #{tpu_custom_call.1} parent=1 // loop_header
      %s21 = sphi 0, %s25
      %p22 = scmp.ge.s32.totalorder %s21, 6
      %s28 = sphi 0, %s47
      %s29 = sphi 0, %s43
      %s30 = sphi 0, %s39
      %s31 = sphi 0, %s28
      %s32 = sphi 0, %s29
      %s33 = sphi 0, %s30
      %s34 = sphi 0, %s31
      %s35 = sphi 0, %s32
      %s36 = sphi 0, %s33
      %s52 = sphi 0, %s54
      %s55 = sphi 0, %s52
      %s56 = sphi 0, %s55
      %s72 = sphi 0, %s56
      %s80 = sphi 0, %s82
      %s83 = sphi 0, %s80
      %s84 = sphi 0, %s83
      %s100 = sphi 0, %s84
      %s106 = sphi 0, %s108
      %s109 = sphi 0, %s106
      %s110 = sphi 0, %s109
      %s126 = sphi 0, %s110
      %s134 = sphi 0, %s136
      %s137 = sphi 0, %s134
      %s138 = sphi 0, %s137
      %s154 = sphi 0, %s138
      %s162 = sphi 0, %s164
      %s165 = sphi 0, %s162
      %s166 = sphi 0, %s165
      %s182 = sphi 0, %s166
    $region4: #{tpu_custom_call.1} parent=1 // loop_header_branch
      %24 = sbr.rel (%p22) target = $region8
    $region5: #{tpu_custom_call.1} parent=1 // loop_body
      %s26 = ssub.s32 %s21, 1
      %s27 = ssub.s32 %s21, 2
      %s37 = sadd.s32 1, %s30
      %p38 = scmp.ge.s32.totalorder %s37, 1
      %s39 = scalar_select %p38, 0, %s37
      %s40 = sadd.s32 1, %s29
      %s41 = scalar_select %p38, %s40, %s29
      %p42 = scmp.ge.s32.totalorder %s41, 4
      %s43 = scalar_select %p42, 0, %s41
      %s44 = sadd.s32 1, %s28
      %s45 = scalar_select %p42, %s44, %s28
      %p46 = scmp.ge.s32.totalorder %s45, 1
      %s47 = scalar_select %p46, 0, %s45
      %s48 = ssub.s32 %s28, %s47
      %s49 = ssub.s32 %s30, %s39
      %s50 = sor.u32 %s48, %s49
      %p51 = scmp.eq.s32.totalorder %s50, 0
      %s53 = sadd.s32 %s52, 1
      %s54 = scalar_select %p51, %s52, %s53
      %p57 = pneg %p51
      %p58 = scmp.eq.s32.totalorder %s21, 3
      %p59 = por %p57, %p58
      %p60 = scmp.ne.s32.totalorder %s52, %s55
      %p61 = scmp.eq.s32.totalorder %s21, 0
      %p62 = por %p60, %p61
      %p63 = scmp.ne.s32.totalorder %s52, %s55
      %p64 = scmp.eq.s32.totalorder %s26, 3
      %p65 = por %p63, %p64
      %p66 = scmp.ne.s32.totalorder %s55, %s56
      %p67 = scmp.eq.s32.totalorder %s26, 0
      %p68 = por %p66, %p67
      %p69 = scmp.ne.s32.totalorder %s55, %s56
      %p70 = scmp.eq.s32.totalorder %s27, 3
      %p71 = por %p69, %p70
      %p73 = scmp.ne.s32.totalorder %s56, %s72
      %p74 = scmp.eq.s32.totalorder %s27, 0
      %p75 = por %p73, %p74
      %s76 = ssub.s32 %s30, %s39
      %s77 = ssub.s32 %s29, %s43
      %s78 = sor.u32 %s76, %s77
      %p79 = scmp.eq.s32.totalorder %s78, 0
      %s81 = sadd.s32 %s80, 1
      %s82 = scalar_select %p79, %s80, %s81
      %p85 = pneg %p79
      %p86 = scmp.eq.s32.totalorder %s21, 3
      %p87 = por %p85, %p86
      %p88 = scmp.ne.s32.totalorder %s80, %s83
      %p89 = scmp.eq.s32.totalorder %s21, 0
      %p90 = por %p88, %p89
      %p91 = scmp.ne.s32.totalorder %s80, %s83
      %p92 = scmp.eq.s32.totalorder %s26, 3
      %p93 = por %p91, %p92
      %p94 = scmp.ne.s32.totalorder %s83, %s84
      %p95 = scmp.eq.s32.totalorder %s26, 0
      %p96 = por %p94, %p95
      %p97 = scmp.ne.s32.totalorder %s83, %s84
      %p98 = scmp.eq.s32.totalorder %s27, 3
      %p99 = por %p97, %p98
      %p101 = scmp.ne.s32.totalorder %s84, %s100
      %p102 = scmp.eq.s32.totalorder %s27, 0
      %p103 = por %p101, %p102
      %s104 = ssub.s32 %s29, %s43
      %p105 = scmp.eq.s32.totalorder %s104, 0
      %s107 = sadd.s32 %s106, 1
      %s108 = scalar_select %p105, %s106, %s107
      %p111 = pneg %p105
      %p112 = scmp.eq.s32.totalorder %s21, 3
      %p113 = por %p111, %p112
      %p114 = scmp.ne.s32.totalorder %s106, %s109
      %p115 = scmp.eq.s32.totalorder %s21, 0
      %p116 = por %p114, %p115
      %p117 = scmp.ne.s32.totalorder %s106, %s109
      %p118 = scmp.eq.s32.totalorder %s26, 3
      %p119 = por %p117, %p118
      %p120 = scmp.ne.s32.totalorder %s109, %s110
      %p121 = scmp.eq.s32.totalorder %s26, 0
      %p122 = por %p120, %p121
      %p123 = scmp.ne.s32.totalorder %s109, %s110
      %p124 = scmp.eq.s32.totalorder %s27, 3
      %p125 = por %p123, %p124
      %p127 = scmp.ne.s32.totalorder %s110, %s126
      %p128 = scmp.eq.s32.totalorder %s27, 0
      %p129 = por %p127, %p128
      %s130 = ssub.s32 %s28, %s47
      %s131 = ssub.s32 %s29, %s43
      %s132 = sor.u32 %s130, %s131
      %p133 = scmp.eq.s32.totalorder %s132, 0
      %s135 = sadd.s32 %s134, 1
      %s136 = scalar_select %p133, %s134, %s135
      %p139 = pneg %p133
      %p140 = scmp.eq.s32.totalorder %s21, 3
      %p141 = por %p139, %p140
      %p142 = scmp.ne.s32.totalorder %s134, %s137
      %p143 = scmp.eq.s32.totalorder %s21, 0
      %p144 = por %p142, %p143
      %p145 = scmp.ne.s32.totalorder %s134, %s137
      %p146 = scmp.eq.s32.totalorder %s26, 3
      %p147 = por %p145, %p146
      %p148 = scmp.ne.s32.totalorder %s137, %s138
      %p149 = scmp.eq.s32.totalorder %s26, 0
      %p150 = por %p148, %p149
      %p151 = scmp.ne.s32.totalorder %s137, %s138
      %p152 = scmp.eq.s32.totalorder %s27, 3
      %p153 = por %p151, %p152
      %p155 = scmp.ne.s32.totalorder %s138, %s154
      %p156 = scmp.eq.s32.totalorder %s27, 0
      %p157 = por %p155, %p156
      %s158 = ssub.s32 %s28, %s47
      %s159 = ssub.s32 %s29, %s43
      %s160 = sor.u32 %s158, %s159
      %p161 = scmp.eq.s32.totalorder %s160, 0
      %s163 = sadd.s32 %s162, 1
      %s164 = scalar_select %p161, %s162, %s163
      %p167 = pneg %p161
      %p168 = scmp.eq.s32.totalorder %s21, 3
      %p169 = por %p167, %p168
      %p170 = scmp.ne.s32.totalorder %s162, %s165
      %p171 = scmp.eq.s32.totalorder %s21, 0
      %p172 = por %p170, %p171
      %p173 = scmp.ne.s32.totalorder %s162, %s165
      %p174 = scmp.eq.s32.totalorder %s26, 3
      %p175 = por %p173, %p174
      %p176 = scmp.ne.s32.totalorder %s165, %s166
      %p177 = scmp.eq.s32.totalorder %s26, 0
      %p178 = por %p176, %p177
      %p179 = scmp.ne.s32.totalorder %s165, %s166
      %p180 = scmp.eq.s32.totalorder %s27, 3
      %p181 = por %p179, %p180
      %p183 = scmp.ne.s32.totalorder %s166, %s182
      %p184 = scmp.eq.s32.totalorder %s27, 0
      %p185 = por %p183, %p184
      %p186 = scmp.le.s32.totalorder 1, %s21
      %p187 = scmp.lt.s32.totalorder %s21, 5
      %p188 = pnand %p186, %p187
      %p189 = pneg %p188
      // Predicated region
      $region9: #{tpu_custom_call.1} parent=5 // pred_check
        _
      $region10: #{tpu_custom_call.1} parent=5 // pred_check_branch
        %191 = sbr.rel (%p188) target = $region12
      $region11: #{tpu_custom_call.1} parent=5 // pred_region
        %s192 = ssub.s32 %s21, 1
        // Predicated region
        $region13: #{tpu_custom_call.1} parent=11 // pred_check
          %p193 = pneg %p68
        $region14: #{tpu_custom_call.1} parent=11 // pred_check_branch
          %195 = sbr.rel (%p193) target = $region16
        $region15: #{tpu_custom_call.1} parent=11 // pred_region
          %s196 = smul.u32 2, %s33
          %s198 = ssub.s32 128, 128
          %199 = vsyncadd [#allocation4], %s198
          %s200 = smul.addr %s31, 2
          %s201 = sadd.s32 %s196, %s200
          %s202 = smul.addr %s201, 64
          %s203 = scalar_lea.hbm %s0, %s202
          %s205 = sshll.u32 [#allocation3], 4
          %s206 = int_to_ptr.vmem [resolvable:$true] %s205
          %208 = dma.hbm_to_vmem [thread:$0]  %s203, 128, %s206, [#allocation4]
        $region16: #{tpu_custom_call.1} parent=11 // pred_fallthru
          _
      $region12: #{tpu_custom_call.1} parent=5 // pred_fallthru
        _
      %p209 = scmp.lt.s32.totalorder %s21, 4
      // Predicated region
      $region17: #{tpu_custom_call.1} parent=5 // pred_check
        %p210 = pneg %p209
      $region18: #{tpu_custom_call.1} parent=5 // pred_check_branch
        %212 = sbr.rel (%p210) target = $region20
      $region19: #{tpu_custom_call.1} parent=5 // pred_region
        // Predicated region
        $region21: #{tpu_custom_call.1} parent=19 // pred_check
          %p213 = pneg %p90
        $region22: #{tpu_custom_call.1} parent=19 // pred_check_branch
          %215 = sbr.rel (%p213) target = $region24
        $region23: #{tpu_custom_call.1} parent=19 // pred_region
          %s216 = sand.u32 %s21, 1
          %s217 = scalar_lea.sflag [#allocation7], %s216
          %s218 = sand.u32 %s80, 1
          %s219 = smul.addr %s218, 512
          %s220 = scalar_lea.vmem [#allocation6], %s219
          %s221 = smul.u32 8, %s30
          %s222 = smul.u32 8, %s29
          %s224 = ssub.s32 8192, 8192
          %225 = vsyncadd %s217, %s224
          %s226 = smul.addr %s221, 32
          %s227 = sadd.s32 %s222, %s226
          %s228 = smul.addr %s227, 128
          %s229 = scalar_lea.hbm %s1, %s228
          %s230 = sshll.u32 %s220, 4
          %s231 = int_to_ptr.vmem [resolvable:$true] %s230
          %236 = dma.hbm_to_vmem [thread:$0]  %s229, 8192, %s231, %s217, 4096, 1024, 64
        $region24: #{tpu_custom_call.1} parent=19 // pred_fallthru
          _
        // Predicated region
        $region25: #{tpu_custom_call.1} parent=19 // pred_check
          %p237 = pneg %p116
        $region26: #{tpu_custom_call.1} parent=19 // pred_check_branch
          %239 = sbr.rel (%p237) target = $region28
        $region27: #{tpu_custom_call.1} parent=19 // pred_region
          %s240 = sand.u32 %s21, 1
          %s241 = scalar_lea.sflag [#allocation7], %s240
          %s242 = sand.u32 %s106, 1
          %s243 = smul.addr %s242, 8
          %s244 = scalar_lea.vmem [#allocation8], %s243
          %s245 = smul.u32 8, %s29
          %s247 = ssub.s32 128, 128
          %248 = vsyncadd %s241, %s247
          %s249 = smul.addr %s245, 16
          %s250 = scalar_lea.hbm %s2, %s249
          %s252 = sshll.u32 %s244, 4
          %s253 = int_to_ptr.vmem [resolvable:$true] %s252
          %255 = dma.hbm_to_vmem [thread:$0]  %s250, 128, %s253, %s241
        $region28: #{tpu_custom_call.1} parent=19 // pred_fallthru
          _
      $region20: #{tpu_custom_call.1} parent=5 // pred_fallthru
        _
      %p256 = scmp.le.s32.totalorder 1, %s21
      %p257 = scmp.lt.s32.totalorder %s21, 5
      %p258 = pnand %p256, %p257
      %p259 = pneg %p258
      // Predicated region
      $region29: #{tpu_custom_call.1} parent=5 // pred_check
        _
      $region30: #{tpu_custom_call.1} parent=5 // pred_check_branch
        %261 = sbr.rel (%p258) target = $region32
      $region31: #{tpu_custom_call.1} parent=5 // pred_region
        %s262 = ssub.s32 %s21, 1
        // Predicated region
        $region33: #{tpu_custom_call.1} parent=31 // pred_check
          %p263 = pneg %p68
        $region34: #{tpu_custom_call.1} parent=31 // pred_check_branch
          %265 = sbr.rel (%p263) target = $region36
        $region35: #{tpu_custom_call.1} parent=31 // pred_region
          %266 = dma.done [#allocation4], 128
        $region36: #{tpu_custom_call.1} parent=31 // pred_fallthru
          _
        %s267 = sand.u32 %s26, 1
        %s268 = scalar_lea.sflag [#allocation7], %s267
        %s269 = sand.u32 %s83, 1
        %s270 = smul.addr %s269, 512
        %s271 = scalar_lea.vmem [#allocation6], %s270
        // Predicated region
        $region37: #{tpu_custom_call.1} parent=31 // pred_check
          %p272 = pneg %p96
        $region38: #{tpu_custom_call.1} parent=31 // pred_check_branch
          %274 = sbr.rel (%p272) target = $region40
        $region39: #{tpu_custom_call.1} parent=31 // pred_region
          %275 = dma.done %s268, 8192
        $region40: #{tpu_custom_call.1} parent=31 // pred_fallthru
          _
        %s276 = sand.u32 %s26, 1
        %s277 = scalar_lea.sflag [#allocation7], %s276
        %s278 = sand.u32 %s109, 1
        %s279 = smul.addr %s278, 8
        %s280 = scalar_lea.vmem [#allocation8], %s279
        // Predicated region
        $region41: #{tpu_custom_call.1} parent=31 // pred_check
          %p281 = pneg %p122
        $region42: #{tpu_custom_call.1} parent=31 // pred_check_branch
          %283 = sbr.rel (%p281) target = $region44
        $region43: #{tpu_custom_call.1} parent=31 // pred_region
          %284 = dma.done %s277, 128
        $region44: #{tpu_custom_call.1} parent=31 // pred_fallthru
          _
        %p285 = pneg %p68
        %p286 = pneg %p65
        %s287 = sand.u32 %s26, 1
        %s288 = scalar_lea.sflag [#allocation7], %s287
        %s289 = sand.u32 %s83, 1
        %s290 = smul.addr %s289, 512
        %s291 = scalar_lea.vmem [#allocation6], %s290
        %p292 = pneg %p96
        %p293 = pneg %p93
        %s294 = sand.u32 %s26, 1
        %s295 = scalar_lea.sflag [#allocation7], %s294
        %s296 = sand.u32 %s109, 1
        %s297 = smul.addr %s296, 8
        %s298 = scalar_lea.vmem [#allocation8], %s297
        %p299 = pneg %p122
        %p300 = pneg %p119
        %p301 = pneg %p150
        %p302 = pneg %p147
        %s303 = sand.u32 %s137, 1
        %s304 = scalar_lea.sflag [#allocation5], %s303
        %s305 = sand.u32 %s137, 1
        %s306 = smul.addr %s305, 32
        %s307 = scalar_lea.vmem [#allocation9], %s306
        %p308 = pneg %p178
        %p309 = pneg %p175
        %s310 = sand.u32 %s165, 1
        %s311 = scalar_lea.sflag [#allocation11], %s310
        %s312 = sand.u32 %s165, 1
        %s313 = smul.addr %s312, 32
        %s314 = scalar_lea.vmem [#allocation10], %s313
        %s315 = smul.u32 2, %s33
        %s316 = smul.u32 8, %s33
        %s317 = smul.u32 8, %s32
        %s318 = smul.u32 8, %s32
        %s319 = smul.u32 4, %s32
        %s320 = smul.u32 4, %s32
        %p321 = scmp.eq.s32.totalorder %s33, 0
        // Predicated region
        $region45: #{tpu_custom_call.1} parent=31 // pred_check
          %p322 = pneg %p321
        $region46: #{tpu_custom_call.1} parent=31 // pred_check_branch
          %324 = sbr.rel (%p322) target = $region48
        $region47: #{tpu_custom_call.1} parent=31 // pred_region
          %325 = vst [vmem:[#allocation2] sm:$0xff] 0.0
          %326 = vst [vmem:[#allocation2 + $0x8] sm:$0xff] 0.0
          %327 = vst [vmem:[#allocation2 + $0x10] sm:$0xff] 0.0
          %328 = vst [vmem:[#allocation2 + $0x18] sm:$0xff] 0.0
          %329 = vst [vmem:[#allocation2 + $0x20] sm:$0xff] 0.0
          %330 = vst [vmem:[#allocation2 + $0x28] sm:$0xff] 0.0
          %331 = vst [vmem:[#allocation2 + $0x30] sm:$0xff] 0.0
          %332 = vst [vmem:[#allocation2 + $0x38] sm:$0xff] 0.0
        $region48: #{tpu_custom_call.1} parent=31 // pred_fallthru
          _
        %v333 = vld [vmem:[#allocation2] sm:$0xff]
        %v334 = vld [vmem:[#allocation2 + $0x8] sm:$0xff]
        %v335 = vld [vmem:[#allocation2 + $0x10] sm:$0xff]
        %v336 = vld [vmem:[#allocation2 + $0x18] sm:$0xff]
        %v337 = vld [vmem:[#allocation2 + $0x20] sm:$0xff]
        %v338 = vld [vmem:[#allocation2 + $0x28] sm:$0xff]
        %v339 = vld [vmem:[#allocation2 + $0x30] sm:$0xff]
        %v340 = vld [vmem:[#allocation2 + $0x38] sm:$0xff]
        %v341 = vld [vmem:[#allocation3] sm:$0xff]
        %v342 = vld [vmem:[%s271] sm:$0xff]
        %v343 = vld [vmem:[%s271 + $0x8] sm:$0xff]
        %v344 = vld [vmem:[%s271 + $0x10] sm:$0xff]
        %v345 = vld [vmem:[%s271 + $0x18] sm:$0xff]
        %v346 = vld [vmem:[%s271 + $0x20] sm:$0xff]
        %v347 = vld [vmem:[%s271 + $0x28] sm:$0xff]
        %v348 = vld [vmem:[%s271 + $0x30] sm:$0xff]
        %v349 = vld [vmem:[%s271 + $0x38] sm:$0xff]
        %v350 = vld [vmem:[%s271 + $0x40] sm:$0xff]
        %v351 = vld [vmem:[%s271 + $0x48] sm:$0xff]
        %v352 = vld [vmem:[%s271 + $0x50] sm:$0xff]
        %v353 = vld [vmem:[%s271 + $0x58] sm:$0xff]
        %v354 = vld [vmem:[%s271 + $0x60] sm:$0xff]
        %v355 = vld [vmem:[%s271 + $0x68] sm:$0xff]
        %v356 = vld [vmem:[%s271 + $0x70] sm:$0xff]
        %v357 = vld [vmem:[%s271 + $0x78] sm:$0xff]
        %v358 = vld [vmem:[%s271 + $0x80] sm:$0xff]
        %v359 = vld [vmem:[%s271 + $0x88] sm:$0xff]
        %v360 = vld [vmem:[%s271 + $0x90] sm:$0xff]
        %v361 = vld [vmem:[%s271 + $0x98] sm:$0xff]
        %v362 = vld [vmem:[%s271 + $0xa0] sm:$0xff]
        %v363 = vld [vmem:[%s271 + $0xa8] sm:$0xff]
        %v364 = vld [vmem:[%s271 + $0xb0] sm:$0xff]
        %v365 = vld [vmem:[%s271 + $0xb8] sm:$0xff]
        %v366 = vld [vmem:[%s271 + $0xc0] sm:$0xff]
        %v367 = vld [vmem:[%s271 + $0xc8] sm:$0xff]
        %v368 = vld [vmem:[%s271 + $0xd0] sm:$0xff]
        %v369 = vld [vmem:[%s271 + $0xd8] sm:$0xff]
        %v370 = vld [vmem:[%s271 + $0xe0] sm:$0xff]
        %v371 = vld [vmem:[%s271 + $0xe8] sm:$0xff]
        %v372 = vld [vmem:[%s271 + $0xf0] sm:$0xff]
        %v373 = vld [vmem:[%s271 + $0xf8] sm:$0xff]
        %v374 = vld [vmem:[%s271 + $0x100] sm:$0xff]
        %v375 = vld [vmem:[%s271 + $0x108] sm:$0xff]
        %v376 = vld [vmem:[%s271 + $0x110] sm:$0xff]
        %v377 = vld [vmem:[%s271 + $0x118] sm:$0xff]
        %v378 = vld [vmem:[%s271 + $0x120] sm:$0xff]
        %v379 = vld [vmem:[%s271 + $0x128] sm:$0xff]
        %v380 = vld [vmem:[%s271 + $0x130] sm:$0xff]
        %v381 = vld [vmem:[%s271 + $0x138] sm:$0xff]
        %v382 = vld [vmem:[%s271 + $0x140] sm:$0xff]
        %v383 = vld [vmem:[%s271 + $0x148] sm:$0xff]
        %v384 = vld [vmem:[%s271 + $0x150] sm:$0xff]
        %v385 = vld [vmem:[%s271 + $0x158] sm:$0xff]
        %v386 = vld [vmem:[%s271 + $0x160] sm:$0xff]
        %v387 = vld [vmem:[%s271 + $0x168] sm:$0xff]
        %v388 = vld [vmem:[%s271 + $0x170] sm:$0xff]
        %v389 = vld [vmem:[%s271 + $0x178] sm:$0xff]
        %v390 = vld [vmem:[%s271 + $0x180] sm:$0xff]
        %v391 = vld [vmem:[%s271 + $0x188] sm:$0xff]
        %v392 = vld [vmem:[%s271 + $0x190] sm:$0xff]
        %v393 = vld [vmem:[%s271 + $0x198] sm:$0xff]
        %v394 = vld [vmem:[%s271 + $0x1a0] sm:$0xff]
        %v395 = vld [vmem:[%s271 + $0x1a8] sm:$0xff]
        %v396 = vld [vmem:[%s271 + $0x1b0] sm:$0xff]
        %v397 = vld [vmem:[%s271 + $0x1b8] sm:$0xff]
        %v398 = vld [vmem:[%s271 + $0x1c0] sm:$0xff]
        %v399 = vld [vmem:[%s271 + $0x1c8] sm:$0xff]
        %v400 = vld [vmem:[%s271 + $0x1d0] sm:$0xff]
        %v401 = vld [vmem:[%s271 + $0x1d8] sm:$0xff]
        %v402 = vld [vmem:[%s271 + $0x1e0] sm:$0xff]
        %v403 = vld [vmem:[%s271 + $0x1e8] sm:$0xff]
        %v404 = vld [vmem:[%s271 + $0x1f0] sm:$0xff]
        %v405 = vld [vmem:[%s271 + $0x1f8] sm:$0xff]
        %v406 = vunpack.c.l.s8.bf16 %v342
        %v407 = vunpack.c.l.s8.bf16 %v343
        %v408 = vunpack.c.l.s8.bf16 %v344
        %v409 = vunpack.c.l.s8.bf16 %v345
        %v410 = vunpack.c.l.s8.bf16 %v346
        %v411 = vunpack.c.l.s8.bf16 %v347
        %v412 = vunpack.c.l.s8.bf16 %v348
        %v413 = vunpack.c.l.s8.bf16 %v349
        %v414 = vunpack.c.h.s8.bf16 %v342
        %v415 = vunpack.c.h.s8.bf16 %v343
        %v416 = vunpack.c.h.s8.bf16 %v344
        %v417 = vunpack.c.h.s8.bf16 %v345
        %v418 = vunpack.c.h.s8.bf16 %v346
        %v419 = vunpack.c.h.s8.bf16 %v347
        %v420 = vunpack.c.h.s8.bf16 %v348
        %v421 = vunpack.c.h.s8.bf16 %v349
        %v422 = vunpack.c.l.s8.bf16 %v350
        %v423 = vunpack.c.l.s8.bf16 %v351
        %v424 = vunpack.c.l.s8.bf16 %v352
        %v425 = vunpack.c.l.s8.bf16 %v353
        %v426 = vunpack.c.l.s8.bf16 %v354
        %v427 = vunpack.c.l.s8.bf16 %v355
        %v428 = vunpack.c.l.s8.bf16 %v356
        %v429 = vunpack.c.l.s8.bf16 %v357
        %v430 = vunpack.c.h.s8.bf16 %v350
        %v431 = vunpack.c.h.s8.bf16 %v351
        %v432 = vunpack.c.h.s8.bf16 %v352
        %v433 = vunpack.c.h.s8.bf16 %v353
        %v434 = vunpack.c.h.s8.bf16 %v354
        %v435 = vunpack.c.h.s8.bf16 %v355
        %v436 = vunpack.c.h.s8.bf16 %v356
        %v437 = vunpack.c.h.s8.bf16 %v357
        %v438 = vunpack.c.l.s8.bf16 %v358
        %v439 = vunpack.c.l.s8.bf16 %v359
        %v440 = vunpack.c.l.s8.bf16 %v360
        %v441 = vunpack.c.l.s8.bf16 %v361
        %v442 = vunpack.c.l.s8.bf16 %v362
        %v443 = vunpack.c.l.s8.bf16 %v363
        %v444 = vunpack.c.l.s8.bf16 %v364
        %v445 = vunpack.c.l.s8.bf16 %v365
        %v446 = vunpack.c.h.s8.bf16 %v358
        %v447 = vunpack.c.h.s8.bf16 %v359
        %v448 = vunpack.c.h.s8.bf16 %v360
        %v449 = vunpack.c.h.s8.bf16 %v361
        %v450 = vunpack.c.h.s8.bf16 %v362
        %v451 = vunpack.c.h.s8.bf16 %v363
        %v452 = vunpack.c.h.s8.bf16 %v364
        %v453 = vunpack.c.h.s8.bf16 %v365
        %v454 = vunpack.c.l.s8.bf16 %v366
        %v455 = vunpack.c.l.s8.bf16 %v367
        %v456 = vunpack.c.l.s8.bf16 %v368
        %v457 = vunpack.c.l.s8.bf16 %v369
        %v458 = vunpack.c.l.s8.bf16 %v370
        %v459 = vunpack.c.l.s8.bf16 %v371
        %v460 = vunpack.c.l.s8.bf16 %v372
        %v461 = vunpack.c.l.s8.bf16 %v373
        %v462 = vunpack.c.h.s8.bf16 %v366
        %v463 = vunpack.c.h.s8.bf16 %v367
        %v464 = vunpack.c.h.s8.bf16 %v368
        %v465 = vunpack.c.h.s8.bf16 %v369
        %v466 = vunpack.c.h.s8.bf16 %v370
        %v467 = vunpack.c.h.s8.bf16 %v371
        %v468 = vunpack.c.h.s8.bf16 %v372
        %v469 = vunpack.c.h.s8.bf16 %v373
        %v470 = vunpack.c.l.s8.bf16 %v374
        %v471 = vunpack.c.l.s8.bf16 %v375
        %v472 = vunpack.c.l.s8.bf16 %v376
        %v473 = vunpack.c.l.s8.bf16 %v377
        %v474 = vunpack.c.l.s8.bf16 %v378
        %v475 = vunpack.c.l.s8.bf16 %v379
        %v476 = vunpack.c.l.s8.bf16 %v380
        %v477 = vunpack.c.l.s8.bf16 %v381
        %v478 = vunpack.c.h.s8.bf16 %v374
        %v479 = vunpack.c.h.s8.bf16 %v375
        %v480 = vunpack.c.h.s8.bf16 %v376
        %v481 = vunpack.c.h.s8.bf16 %v377
        %v482 = vunpack.c.h.s8.bf16 %v378
        %v483 = vunpack.c.h.s8.bf16 %v379
        %v484 = vunpack.c.h.s8.bf16 %v380
        %v485 = vunpack.c.h.s8.bf16 %v381
        %v486 = vunpack.c.l.s8.bf16 %v382
        %v487 = vunpack.c.l.s8.bf16 %v383
        %v488 = vunpack.c.l.s8.bf16 %v384
        %v489 = vunpack.c.l.s8.bf16 %v385
        %v490 = vunpack.c.l.s8.bf16 %v386
        %v491 = vunpack.c.l.s8.bf16 %v387
        %v492 = vunpack.c.l.s8.bf16 %v388
        %v493 = vunpack.c.l.s8.bf16 %v389
        %v494 = vunpack.c.h.s8.bf16 %v382
        %v495 = vunpack.c.h.s8.bf16 %v383
        %v496 = vunpack.c.h.s8.bf16 %v384
        %v497 = vunpack.c.h.s8.bf16 %v385
        %v498 = vunpack.c.h.s8.bf16 %v386
        %v499 = vunpack.c.h.s8.bf16 %v387
        %v500 = vunpack.c.h.s8.bf16 %v388
        %v501 = vunpack.c.h.s8.bf16 %v389
        %v502 = vunpack.c.l.s8.bf16 %v390
        %v503 = vunpack.c.l.s8.bf16 %v391
        %v504 = vunpack.c.l.s8.bf16 %v392
        %v505 = vunpack.c.l.s8.bf16 %v393
        %v506 = vunpack.c.l.s8.bf16 %v394
        %v507 = vunpack.c.l.s8.bf16 %v395
        %v508 = vunpack.c.l.s8.bf16 %v396
        %v509 = vunpack.c.l.s8.bf16 %v397
        %v510 = vunpack.c.h.s8.bf16 %v390
        %v511 = vunpack.c.h.s8.bf16 %v391
        %v512 = vunpack.c.h.s8.bf16 %v392
        %v513 = vunpack.c.h.s8.bf16 %v393
        %v514 = vunpack.c.h.s8.bf16 %v394
        %v515 = vunpack.c.h.s8.bf16 %v395
        %v516 = vunpack.c.h.s8.bf16 %v396
        %v517 = vunpack.c.h.s8.bf16 %v397
        %v518 = vunpack.c.l.s8.bf16 %v398
        %v519 = vunpack.c.l.s8.bf16 %v399
        %v520 = vunpack.c.l.s8.bf16 %v400
        %v521 = vunpack.c.l.s8.bf16 %v401
        %v522 = vunpack.c.l.s8.bf16 %v402
        %v523 = vunpack.c.l.s8.bf16 %v403
        %v524 = vunpack.c.l.s8.bf16 %v404
        %v525 = vunpack.c.l.s8.bf16 %v405
        %v526 = vunpack.c.h.s8.bf16 %v398
        %v527 = vunpack.c.h.s8.bf16 %v399
        %v528 = vunpack.c.h.s8.bf16 %v400
        %v529 = vunpack.c.h.s8.bf16 %v401
        %v530 = vunpack.c.h.s8.bf16 %v402
        %v531 = vunpack.c.h.s8.bf16 %v403
        %v532 = vunpack.c.h.s8.bf16 %v404
        %v533 = vunpack.c.h.s8.bf16 %v405
        %v535 = vunpack.c.l.b16 %v341
        %v536 = vunpack.c.h.b16 %v341
        %v537 = vpack.c.b16 %v535, %v535
        %v538 = vpack.c.b16 %v536, %v536
        %541 = vmatprep.subr.bf16.mxu0 %v407
        %542 = vmatpush1.bf16.msra.mxu0 %v406
        %543 = vmatprep.subr.bf16.mxu0 %v415
        %544 = vmatpush1.bf16.msra.mxu0 %v414
        %545 = vmatprep.subr.bf16.mxu0 %v423
        %546 = vmatpush1.bf16.msra.mxu0 %v422
        %547 = vmatprep.subr.bf16.mxu0 %v431
        %548 = vmatpush1.bf16.msra.mxu0 %v430
        %549 = vmatprep.subr.bf16.mxu0 %v439
        %550 = vmatpush1.bf16.msra.mxu0 %v438
        %551 = vmatprep.subr.bf16.mxu0 %v447
        %552 = vmatpush1.bf16.msra.mxu0 %v446
        %553 = vmatprep.subr.bf16.mxu0 %v455
        %554 = vmatpush1.bf16.msra.mxu0 %v454
        %555 = vmatprep.subr.bf16.mxu0 %v463
        %556 = vmatpush1.bf16.msra.mxu0 %v462
        %557 = vmatprep.subr.bf16.mxu0 %v471
        %558 = vmatpush1.bf16.msra.mxu0 %v470
        %559 = vmatprep.subr.bf16.mxu0 %v479
        %560 = vmatpush1.bf16.msra.mxu0 %v478
        %561 = vmatprep.subr.bf16.mxu0 %v487
        %562 = vmatpush1.bf16.msra.mxu0 %v486
        %563 = vmatprep.subr.bf16.mxu0 %v495
        %564 = vmatpush1.bf16.msra.mxu0 %v494
        %565 = vmatprep.subr.bf16.mxu0 %v503
        %566 = vmatpush1.bf16.msra.mxu0 %v502
        %567 = vmatprep.subr.bf16.mxu0 %v511
        %568 = vmatpush1.bf16.msra.mxu0 %v510
        %569 = vmatprep.subr.bf16.mxu0 %v519
        %570 = vmatpush1.bf16.msra.mxu0 %v518
        %571 = vmatprep.subr.bf16.mxu0 %v527
        %572 = vmatpush1.bf16.msra.mxu0 %v526
        %573 = vmatprep.mubr.bf16.mxu0 %v538
        %574 = vmatmul.mubr.bf16.gmra.mrb[0].mxu0 %v537
        %v575 = vpop.f32.mrb[0].mxu0
        %v576 = vadd.f32 0.0, %v575
        %v577 = vpop.f32.mrb[0].mxu0
        %v578 = vadd.f32 0.0, %v577
        %v579 = vpop.f32.mrb[0].mxu0
        %v580 = vpop.f32.mrb[0].mxu0
        %581 = vdwg.mxu0
        %582 = vmatprep.subr.bf16.mxu0 %v409
        %583 = vmatpush1.bf16.msra.mxu0 %v408
        %584 = vmatprep.subr.bf16.mxu0 %v417
        %585 = vmatpush1.bf16.msra.mxu0 %v416
        %586 = vmatprep.subr.bf16.mxu0 %v425
        %587 = vmatpush1.bf16.msra.mxu0 %v424
        %588 = vmatprep.subr.bf16.mxu0 %v433
        %589 = vmatpush1.bf16.msra.mxu0 %v432
        %590 = vmatprep.subr.bf16.mxu0 %v441
        %591 = vmatpush1.bf16.msra.mxu0 %v440
        %592 = vmatprep.subr.bf16.mxu0 %v449
        %593 = vmatpush1.bf16.msra.mxu0 %v448
        %594 = vmatprep.subr.bf16.mxu0 %v457
        %595 = vmatpush1.bf16.msra.mxu0 %v456
        %596 = vmatprep.subr.bf16.mxu0 %v465
        %597 = vmatpush1.bf16.msra.mxu0 %v464
        %598 = vmatprep.subr.bf16.mxu0 %v473
        %599 = vmatpush1.bf16.msra.mxu0 %v472
        %600 = vmatprep.subr.bf16.mxu0 %v481
        %601 = vmatpush1.bf16.msra.mxu0 %v480
        %602 = vmatprep.subr.bf16.mxu0 %v489
        %603 = vmatpush1.bf16.msra.mxu0 %v488
        %604 = vmatprep.subr.bf16.mxu0 %v497
        %605 = vmatpush1.bf16.msra.mxu0 %v496
        %606 = vmatprep.subr.bf16.mxu0 %v505
        %607 = vmatpush1.bf16.msra.mxu0 %v504
        %608 = vmatprep.subr.bf16.mxu0 %v513
        %609 = vmatpush1.bf16.msra.mxu0 %v512
        %610 = vmatprep.subr.bf16.mxu0 %v521
        %611 = vmatpush1.bf16.msra.mxu0 %v520
        %612 = vmatprep.subr.bf16.mxu0 %v529
        %613 = vmatpush1.bf16.msra.mxu0 %v528
        %614 = vmatprep.mubr.bf16.mxu0 %v538
        %615 = vmatmul.mubr.bf16.gmra.mrb[0].mxu0 %v537
        %v616 = vpop.f32.mrb[0].mxu0
        %v617 = vadd.f32 0.0, %v616
        %v618 = vpop.f32.mrb[0].mxu0
        %v619 = vadd.f32 0.0, %v618
        %v620 = vpop.f32.mrb[0].mxu0
        %v621 = vpop.f32.mrb[0].mxu0
        %622 = vdwg.mxu0
        %623 = vmatprep.subr.bf16.mxu0 %v411
        %624 = vmatpush1.bf16.msra.mxu0 %v410
        %625 = vmatprep.subr.bf16.mxu0 %v419
        %626 = vmatpush1.bf16.msra.mxu0 %v418
        %627 = vmatprep.subr.bf16.mxu0 %v427
        %628 = vmatpush1.bf16.msra.mxu0 %v426
        %629 = vmatprep.subr.bf16.mxu0 %v435
        %630 = vmatpush1.bf16.msra.mxu0 %v434
        %631 = vmatprep.subr.bf16.mxu0 %v443
        %632 = vmatpush1.bf16.msra.mxu0 %v442
        %633 = vmatprep.subr.bf16.mxu0 %v451
        %634 = vmatpush1.bf16.msra.mxu0 %v450
        %635 = vmatprep.subr.bf16.mxu0 %v459
        %636 = vmatpush1.bf16.msra.mxu0 %v458
        %637 = vmatprep.subr.bf16.mxu0 %v467
        %638 = vmatpush1.bf16.msra.mxu0 %v466
        %639 = vmatprep.subr.bf16.mxu0 %v475
        %640 = vmatpush1.bf16.msra.mxu0 %v474
        %641 = vmatprep.subr.bf16.mxu0 %v483
        %642 = vmatpush1.bf16.msra.mxu0 %v482
        %643 = vmatprep.subr.bf16.mxu0 %v491
        %644 = vmatpush1.bf16.msra.mxu0 %v490
        %645 = vmatprep.subr.bf16.mxu0 %v499
        %646 = vmatpush1.bf16.msra.mxu0 %v498
        %647 = vmatprep.subr.bf16.mxu0 %v507
        %648 = vmatpush1.bf16.msra.mxu0 %v506
        %649 = vmatprep.subr.bf16.mxu0 %v515
        %650 = vmatpush1.bf16.msra.mxu0 %v514
        %651 = vmatprep.subr.bf16.mxu0 %v523
        %652 = vmatpush1.bf16.msra.mxu0 %v522
        %653 = vmatprep.subr.bf16.mxu0 %v531
        %654 = vmatpush1.bf16.msra.mxu0 %v530
        %655 = vmatprep.mubr.bf16.mxu0 %v538
        %656 = vmatmul.mubr.bf16.gmra.mrb[0].mxu0 %v537
        %v657 = vpop.f32.mrb[0].mxu0
        %v658 = vadd.f32 0.0, %v657
        %v659 = vpop.f32.mrb[0].mxu0
        %v660 = vadd.f32 0.0, %v659
        %v661 = vpop.f32.mrb[0].mxu0
        %v662 = vpop.f32.mrb[0].mxu0
        %663 = vdwg.mxu0
        %664 = vmatprep.subr.bf16.mxu0 %v413
        %665 = vmatpush1.bf16.msra.mxu0 %v412
        %666 = vmatprep.subr.bf16.mxu0 %v421
        %667 = vmatpush1.bf16.msra.mxu0 %v420
        %668 = vmatprep.subr.bf16.mxu0 %v429
        %669 = vmatpush1.bf16.msra.mxu0 %v428
        %670 = vmatprep.subr.bf16.mxu0 %v437
        %671 = vmatpush1.bf16.msra.mxu0 %v436
        %672 = vmatprep.subr.bf16.mxu0 %v445
        %673 = vmatpush1.bf16.msra.mxu0 %v444
        %674 = vmatprep.subr.bf16.mxu0 %v453
        %675 = vmatpush1.bf16.msra.mxu0 %v452
        %676 = vmatprep.subr.bf16.mxu0 %v461
        %677 = vmatpush1.bf16.msra.mxu0 %v460
        %678 = vmatprep.subr.bf16.mxu0 %v469
        %679 = vmatpush1.bf16.msra.mxu0 %v468
        %680 = vmatprep.subr.bf16.mxu0 %v477
        %681 = vmatpush1.bf16.msra.mxu0 %v476
        %682 = vmatprep.subr.bf16.mxu0 %v485
        %683 = vmatpush1.bf16.msra.mxu0 %v484
        %684 = vmatprep.subr.bf16.mxu0 %v493
        %685 = vmatpush1.bf16.msra.mxu0 %v492
        %686 = vmatprep.subr.bf16.mxu0 %v501
        %687 = vmatpush1.bf16.msra.mxu0 %v500
        %688 = vmatprep.subr.bf16.mxu0 %v509
        %689 = vmatpush1.bf16.msra.mxu0 %v508
        %690 = vmatprep.subr.bf16.mxu0 %v517
        %691 = vmatpush1.bf16.msra.mxu0 %v516
        %692 = vmatprep.subr.bf16.mxu0 %v525
        %693 = vmatpush1.bf16.msra.mxu0 %v524
        %694 = vmatprep.subr.bf16.mxu0 %v533
        %695 = vmatpush1.bf16.msra.mxu0 %v532
        %696 = vmatprep.mubr.bf16.mxu0 %v538
        %697 = vmatmul.mubr.bf16.gmra.mrb[0].mxu0 %v537
        %v698 = vpop.f32.mrb[0].mxu0
        %v699 = vadd.f32 0.0, %v698
        %v700 = vpop.f32.mrb[0].mxu0
        %v701 = vadd.f32 0.0, %v700
        %v702 = vpop.f32.mrb[0].mxu0
        %v703 = vpop.f32.mrb[0].mxu0
        %704 = vdwg.mxu0
        %v705 = vadd.f32 %v333, %v576
        %v706 = vadd.f32 %v334, %v578
        %v707 = vadd.f32 %v335, %v617
        %v708 = vadd.f32 %v336, %v619
        %v709 = vadd.f32 %v337, %v658
        %v710 = vadd.f32 %v338, %v660
        %v711 = vadd.f32 %v339, %v699
        %v712 = vadd.f32 %v340, %v701
        %713 = vst [vmem:[#allocation2] sm:$0xff] %v705
        %714 = vst [vmem:[#allocation2 + $0x8] sm:$0xff] %v706
        %715 = vst [vmem:[#allocation2 + $0x10] sm:$0xff] %v707
        %716 = vst [vmem:[#allocation2 + $0x18] sm:$0xff] %v708
        %717 = vst [vmem:[#allocation2 + $0x20] sm:$0xff] %v709
        %718 = vst [vmem:[#allocation2 + $0x28] sm:$0xff] %v710
        %719 = vst [vmem:[#allocation2 + $0x30] sm:$0xff] %v711
        %720 = vst [vmem:[#allocation2 + $0x38] sm:$0xff] %v712
        // Predicated region
        $region49: #{tpu_custom_call.1} parent=31 // pred_check
          %p721 = pneg %p321
        $region50: #{tpu_custom_call.1} parent=31 // pred_check_branch
          %723 = sbr.rel (%p721) target = $region52
        $region51: #{tpu_custom_call.1} parent=31 // pred_region
          %v724 = vld [vmem:[#allocation2] sm:$0xff]
          %v725 = vld [vmem:[#allocation2 + $0x8] sm:$0xff]
          %v726 = vld [vmem:[#allocation2 + $0x10] sm:$0xff]
          %v727 = vld [vmem:[#allocation2 + $0x18] sm:$0xff]
          %v728 = vld [vmem:[#allocation2 + $0x20] sm:$0xff]
          %v729 = vld [vmem:[#allocation2 + $0x28] sm:$0xff]
          %v730 = vld [vmem:[#allocation2 + $0x30] sm:$0xff]
          %v731 = vld [vmem:[#allocation2 + $0x38] sm:$0xff]
          %v732 = vld [vmem:[%s280] sm:$0xff]
          %v734 = vlaneseq
          %v735 = vshrl.u32 %v734, 7
          %v736 = vsub.s32 0, %v735
          %v737 = vrot.slane %v732, %v736
          %v738 = vlaneseq
          %v739 = vshrl.u32 %v738, 7
          %v740 = vsub.s32 1, %v739
          %v741 = vrot.slane %v732, %v740
          %v742 = vlaneseq
          %v743 = vshrl.u32 %v742, 7
          %v744 = vsub.s32 2, %v743
          %v745 = vrot.slane %v732, %v744
          %v746 = vlaneseq
          %v747 = vshrl.u32 %v746, 7
          %v748 = vsub.s32 3, %v747
          %v749 = vrot.slane %v732, %v748
          %v750 = vlaneseq
          %v751 = vshrl.u32 %v750, 7
          %v752 = vsub.s32 4, %v751
          %v753 = vrot.slane %v732, %v752
          %v754 = vlaneseq
          %v755 = vshrl.u32 %v754, 7
          %v756 = vsub.s32 5, %v755
          %v757 = vrot.slane %v732, %v756
          %v758 = vlaneseq
          %v759 = vshrl.u32 %v758, 7
          %v760 = vsub.s32 6, %v759
          %v761 = vrot.slane %v732, %v760
          %v762 = vlaneseq
          %v763 = vshrl.u32 %v762, 7
          %v764 = vsub.s32 7, %v763
          %v765 = vrot.slane %v732, %v764
          %v774 = vmul.f32 %v724, %v737
          %v775 = vmul.f32 %v725, %v741
          %v776 = vmul.f32 %v726, %v745
          %v777 = vmul.f32 %v727, %v749
          %v778 = vmul.f32 %v728, %v753
          %v779 = vmul.f32 %v729, %v757
          %v780 = vmul.f32 %v730, %v761
          %v781 = vmul.f32 %v731, %v765
          %p782 = scmp.lt.s32.totalorder %s32, 3
          // Predicated region
          $region53: #{tpu_custom_call.1} parent=51 // pred_check
            %p783 = pneg %p782
          $region54: #{tpu_custom_call.1} parent=51 // pred_check_branch
            %785 = sbr.rel (%p783) target = $region56
          $region55: #{tpu_custom_call.1} parent=51 // pred_region
            %v786 = vmul.f32 %v774, %v774
            %v787 = vmul.f32 %v775, %v775
            %v788 = vmul.f32 %v776, %v776
            %v789 = vmul.f32 %v777, %v777
            %v790 = vmul.f32 %v778, %v778
            %v791 = vmul.f32 %v779, %v779
            %v792 = vmul.f32 %v780, %v780
            %v793 = vmul.f32 %v781, %v781
            %v794 = vadd.f32 %v786, %v790
            %v795 = vadd.f32 %v787, %v791
            %v796 = vadd.f32 %v788, %v792
            %v797 = vadd.f32 %v789, %v793
            %v798 = vrsqrt.pop %v794
            %v799 = vmul.f32 %v794, %v798
            %vm800 = vcmp.eq.f32.partialorder %v794, inf
            %v801 = vsel %vm800, %v794, %v799
            %vm802 = vcmp.eq.f32.partialorder %v794, 0.0
            %v803 = vand.u32 %v794, 2147483648
            %v804 = vsel %vm802, %v803, %v801
            %v805 = vrsqrt.pop %v795
            %v806 = vmul.f32 %v795, %v805
            %vm807 = vcmp.eq.f32.partialorder %v795, inf
            %v808 = vsel %vm807, %v795, %v806
            %vm809 = vcmp.eq.f32.partialorder %v795, 0.0
            %v810 = vand.u32 %v795, 2147483648
            %v811 = vsel %vm809, %v810, %v808
            %v812 = vrsqrt.pop %v796
            %v813 = vmul.f32 %v796, %v812
            %vm814 = vcmp.eq.f32.partialorder %v796, inf
            %v815 = vsel %vm814, %v796, %v813
            %vm816 = vcmp.eq.f32.partialorder %v796, 0.0
            %v817 = vand.u32 %v796, 2147483648
            %v818 = vsel %vm816, %v817, %v815
            %v819 = vrsqrt.pop %v797
            %v820 = vmul.f32 %v797, %v819
            %vm821 = vcmp.eq.f32.partialorder %v797, inf
            %v822 = vsel %vm821, %v797, %v820
            %vm823 = vcmp.eq.f32.partialorder %v797, 0.0
            %v824 = vand.u32 %v797, 2147483648
            %v825 = vsel %vm823, %v824, %v822
            %826 = vst [vmem:[%s307] sm:$0xff] %v804
            %827 = vst [vmem:[%s307 + $0x8] sm:$0xff] %v811
            %828 = vst [vmem:[%s307 + $0x10] sm:$0xff] %v818
            %829 = vst [vmem:[%s307 + $0x18] sm:$0xff] %v825
            %vm830 = vcmp.eq.f32.partialorder %v774, 0.0
            %vm831 = vcmp.eq.f32.partialorder %v775, 0.0
            %vm832 = vcmp.eq.f32.partialorder %v776, 0.0
            %vm833 = vcmp.eq.f32.partialorder %v777, 0.0
            %v834 = vsel %vm830, 1.0, %v774
            %v835 = vsel %vm831, 1.0, %v775
            %v836 = vsel %vm832, 1.0, %v776
            %v837 = vsel %vm833, 1.0, %v777
            %v838 = vrcp.pop %v834
            %v839 = vmul.f32 %v778, %v838
            %v840 = vrcp.pop %v835
            %v841 = vmul.f32 %v779, %v840
            %v842 = vrcp.pop %v836
            %v843 = vmul.f32 %v780, %v842
            %v844 = vrcp.pop %v837
            %v845 = vmul.f32 %v781, %v844
            %vm846 = vcmp.ge.f32.partialorder %v839, 0.0
            %vm847 = vcmp.ge.f32.partialorder %v841, 0.0
            %vm848 = vcmp.ge.f32.partialorder %v843, 0.0
            %vm849 = vcmp.ge.f32.partialorder %v845, 0.0
            %v850 = vsel %vm846, 1.0, -1.0
            %v851 = vsel %vm847, 1.0, -1.0
            %v852 = vsel %vm848, 1.0, -1.0
            %v853 = vsel %vm849, 1.0, -1.0
            %v854 = vand.u32 2147483647, %v839
            %v855 = vand.u32 2147483647, %v841
            %v856 = vand.u32 2147483647, %v843
            %v857 = vand.u32 2147483647, %v845
            %vm858 = vcmp.gt.f32.partialorder %v854, 2.4142137
            %vm859 = vcmp.gt.f32.partialorder %v855, 2.4142137
            %vm860 = vcmp.gt.f32.partialorder %v856, 2.4142137
            %vm861 = vcmp.gt.f32.partialorder %v857, 2.4142137
            %vm862 = vcmp.gt.f32.partialorder %v854, 0.41421357
            %vm863 = vcmp.gt.f32.partialorder %v855, 0.41421357
            %vm864 = vcmp.gt.f32.partialorder %v856, 0.41421357
            %vm865 = vcmp.gt.f32.partialorder %v857, 0.41421357
            %v866 = vsel %vm858, %v854, 1.0
            %v867 = vsel %vm859, %v855, 1.0
            %v868 = vsel %vm860, %v856, 1.0
            %v869 = vsel %vm861, %v857, 1.0
            %v870 = vrcp.pop %v866
            %v871 = vmul.f32 -1.0, %v870
            %v872 = vrcp.pop %v867
            %v873 = vmul.f32 -1.0, %v872
            %v874 = vrcp.pop %v868
            %v875 = vmul.f32 -1.0, %v874
            %v876 = vrcp.pop %v869
            %v877 = vmul.f32 -1.0, %v876
            %v878 = vsub.f32 %v854, 1.0
            %v879 = vsub.f32 %v855, 1.0
            %v880 = vsub.f32 %v856, 1.0
            %v881 = vsub.f32 %v857, 1.0
            %v882 = vadd.f32 %v854, 1.0
            %v883 = vadd.f32 %v855, 1.0
            %v884 = vadd.f32 %v856, 1.0
            %v885 = vadd.f32 %v857, 1.0
            %v886 = vrcp.pop %v882
            %v887 = vmul.f32 %v878, %v886
            %v888 = vrcp.pop %v883
            %v889 = vmul.f32 %v879, %v888
            %v890 = vrcp.pop %v884
            %v891 = vmul.f32 %v880, %v890
            %v892 = vrcp.pop %v885
            %v893 = vmul.f32 %v881, %v892
            %v894 = vsel %vm862, %v887, %v854
            %v895 = vsel %vm863, %v889, %v855
            %v896 = vsel %vm864, %v891, %v856
            %v897 = vsel %vm865, %v893, %v857
            %v898 = vsel %vm858, %v871, %v894
            %v899 = vsel %vm859, %v873, %v895
            %v900 = vsel %vm860, %v875, %v896
            %v901 = vsel %vm861, %v877, %v897
            %v902 = vsel %vm862, 0.7853982, 0.0
            %v903 = vsel %vm863, 0.7853982, 0.0
            %v904 = vsel %vm864, 0.7853982, 0.0
            %v905 = vsel %vm865, 0.7853982, 0.0
            %v906 = vsel %vm858, 1.5707964, %v902
            %v907 = vsel %vm859, 1.5707964, %v903
            %v908 = vsel %vm860, 1.5707964, %v904
            %v909 = vsel %vm861, 1.5707964, %v905
            %v910 = vmul.f32 %v898, %v898
            %v911 = vmul.f32 %v899, %v899
            %v912 = vmul.f32 %v900, %v900
            %v913 = vmul.f32 %v901, %v901
            %v914 = vmul.f32 %v910, 0.080537446
            %v915 = vmul.f32 %v911, 0.080537446
            %v916 = vmul.f32 %v912, 0.080537446
            %v917 = vmul.f32 %v913, 0.080537446
            %v918 = vsub.f32 %v914, 0.13877685
            %v919 = vsub.f32 %v915, 0.13877685
            %v920 = vsub.f32 %v916, 0.13877685
            %v921 = vsub.f32 %v917, 0.13877685
            %v922 = vmul.f32 %v918, %v910
            %v923 = vmul.f32 %v919, %v911
            %v924 = vmul.f32 %v920, %v912
            %v925 = vmul.f32 %v921, %v913
            %v926 = vadd.f32 %v922, 0.19977711
            %v927 = vadd.f32 %v923, 0.19977711
            %v928 = vadd.f32 %v924, 0.19977711
            %v929 = vadd.f32 %v925, 0.19977711
            %v930 = vmul.f32 %v926, %v910
            %v931 = vmul.f32 %v927, %v911
            %v932 = vmul.f32 %v928, %v912
            %v933 = vmul.f32 %v929, %v913
            %v934 = vsub.f32 %v930, 0.3333295
            %v935 = vsub.f32 %v931, 0.3333295
            %v936 = vsub.f32 %v932, 0.3333295
            %v937 = vsub.f32 %v933, 0.3333295
            %v938 = vmul.f32 %v934, %v910
            %v939 = vmul.f32 %v935, %v911
            %v940 = vmul.f32 %v936, %v912
            %v941 = vmul.f32 %v937, %v913
            %v942 = vmul.f32 %v938, %v898
            %v943 = vmul.f32 %v939, %v899
            %v944 = vmul.f32 %v940, %v900
            %v945 = vmul.f32 %v941, %v901
            %v946 = vadd.f32 %v942, %v898
            %v947 = vadd.f32 %v943, %v899
            %v948 = vadd.f32 %v944, %v900
            %v949 = vadd.f32 %v945, %v901
            %v950 = vadd.f32 %v906, %v946
            %v951 = vadd.f32 %v907, %v947
            %v952 = vadd.f32 %v908, %v948
            %v953 = vadd.f32 %v909, %v949
            %v954 = vmul.f32 %v850, %v950
            %v955 = vmul.f32 %v851, %v951
            %v956 = vmul.f32 %v852, %v952
            %v957 = vmul.f32 %v853, %v953
            %vm958 = vcmp.lt.f32.partialorder %v774, 0.0
            %vm959 = vcmp.lt.f32.partialorder %v775, 0.0
            %vm960 = vcmp.lt.f32.partialorder %v776, 0.0
            %vm961 = vcmp.lt.f32.partialorder %v777, 0.0
            %vm962 = vcmp.ge.f32.partialorder %v778, 0.0
            %vm963 = vcmp.ge.f32.partialorder %v779, 0.0
            %vm964 = vcmp.ge.f32.partialorder %v780, 0.0
            %vm965 = vcmp.ge.f32.partialorder %v781, 0.0
            %v966 = vsel %vm962, 3.1415927, -3.1415927
            %v967 = vsel %vm963, 3.1415927, -3.1415927
            %v968 = vsel %vm964, 3.1415927, -3.1415927
            %v969 = vsel %vm965, 3.1415927, -3.1415927
            %v970 = vsel %vm958, %v966, 0.0
            %v971 = vsel %vm959, %v967, 0.0
            %v972 = vsel %vm960, %v968, 0.0
            %v973 = vsel %vm961, %v969, 0.0
            %v974 = vadd.f32 %v954, %v970
            %v975 = vadd.f32 %v955, %v971
            %v976 = vadd.f32 %v956, %v972
            %v977 = vadd.f32 %v957, %v973
            %vm978 = vcmp.gt.f32.partialorder %v778, 0.0
            %vm979 = vcmp.gt.f32.partialorder %v779, 0.0
            %vm980 = vcmp.gt.f32.partialorder %v780, 0.0
            %vm981 = vcmp.gt.f32.partialorder %v781, 0.0
            %vm982 = vcmp.lt.f32.partialorder %v778, 0.0
            %vm983 = vcmp.lt.f32.partialorder %v779, 0.0
            %vm984 = vcmp.lt.f32.partialorder %v780, 0.0
            %vm985 = vcmp.lt.f32.partialorder %v781, 0.0
            %v986 = vsel %vm982, -1.5707964, 0.0
            %v987 = vsel %vm983, -1.5707964, 0.0
            %v988 = vsel %vm984, -1.5707964, 0.0
            %v989 = vsel %vm985, -1.5707964, 0.0
            %v990 = vsel %vm978, 1.5707964, %v986
            %v991 = vsel %vm979, 1.5707964, %v987
            %v992 = vsel %vm980, 1.5707964, %v988
            %v993 = vsel %vm981, 1.5707964, %v989
            %v994 = vsel %vm830, %v990, %v974
            %v995 = vsel %vm831, %v991, %v975
            %v996 = vsel %vm832, %v992, %v976
            %v997 = vsel %vm833, %v993, %v977
            %998 = vst [vmem:[%s314] sm:$0xff] %v994
            %999 = vst [vmem:[%s314 + $0x8] sm:$0xff] %v995
            %1000 = vst [vmem:[%s314 + $0x10] sm:$0xff] %v996
            %1001 = vst [vmem:[%s314 + $0x18] sm:$0xff] %v997
          $region56: #{tpu_custom_call.1} parent=51 // pred_fallthru
            _
          %p1002 = scmp.ge.s32.totalorder %s32, 3
          // Predicated region
          $region57: #{tpu_custom_call.1} parent=51 // pred_check
            %p1003 = pneg %p1002
          $region58: #{tpu_custom_call.1} parent=51 // pred_check_branch
            %1005 = sbr.rel (%p1003) target = $region60
          $region59: #{tpu_custom_call.1} parent=51 // pred_region
            %1006 = vst [vmem:[%s307] sm:$0xff] %v774
            %1007 = vst [vmem:[%s307 + $0x8] sm:$0xff] %v775
            %1008 = vst [vmem:[%s307 + $0x10] sm:$0xff] %v776
            %1009 = vst [vmem:[%s307 + $0x18] sm:$0xff] %v777
            %1010 = vst [vmem:[%s314] sm:$0xff] %v778
            %1011 = vst [vmem:[%s314 + $0x8] sm:$0xff] %v779
            %1012 = vst [vmem:[%s314 + $0x10] sm:$0xff] %v780
            %1013 = vst [vmem:[%s314 + $0x18] sm:$0xff] %v781
          $region60: #{tpu_custom_call.1} parent=51 // pred_fallthru
            _
        $region52: #{tpu_custom_call.1} parent=31 // pred_fallthru
          _
        %s1014 = sand.u32 %s137, 1
        %s1015 = scalar_lea.sflag [#allocation5], %s1014
        %s1016 = sand.u32 %s137, 1
        %s1017 = smul.addr %s1016, 32
        %s1018 = scalar_lea.vmem [#allocation9], %s1017
        %s1019 = sand.u32 %s165, 1
        %s1020 = scalar_lea.sflag [#allocation11], %s1019
        %s1021 = sand.u32 %s165, 1
        %s1022 = smul.addr %s1021, 32
        %s1023 = scalar_lea.vmem [#allocation10], %s1022
        // Predicated region
        $region61: #{tpu_custom_call.1} parent=31 // pred_check
          %p1024 = pneg %p147
        $region62: #{tpu_custom_call.1} parent=31 // pred_check_branch
          %1026 = sbr.rel (%p1024) target = $region64
        $region63: #{tpu_custom_call.1} parent=31 // pred_region
          %s1027 = smul.u32 4, %s32
          %s1029 = ssub.s32 512, 512
          %1030 = vsyncadd %s1015, %s1029
          %s1031 = smul.addr %s31, 16
          %s1032 = sadd.s32 %s1027, %s1031
          %s1033 = smul.addr %s1032, 128
          %s1034 = scalar_lea.hbm %s3, %s1033
          %s1036 = sshll.u32 %s1018, 4
          %s1037 = int_to_ptr.vmem [resolvable:$true] %s1036
          %1039 = dma.vmem_to_hbm [thread:$0]  %s1037, 512, %s1034, %s1015
        $region64: #{tpu_custom_call.1} parent=31 // pred_fallthru
          _
        // Predicated region
        $region65: #{tpu_custom_call.1} parent=31 // pred_check
          %p1040 = pneg %p175
        $region66: #{tpu_custom_call.1} parent=31 // pred_check_branch
          %1042 = sbr.rel (%p1040) target = $region68
        $region67: #{tpu_custom_call.1} parent=31 // pred_region
          %s1043 = smul.u32 4, %s32
          %s1045 = ssub.s32 512, 512
          %1046 = vsyncadd %s1020, %s1045
          %s1047 = smul.addr %s31, 16
          %s1048 = sadd.s32 %s1043, %s1047
          %s1049 = smul.addr %s1048, 128
          %s1050 = scalar_lea.hbm %s4, %s1049
          %s1052 = sshll.u32 %s1023, 4
          %s1053 = int_to_ptr.vmem [resolvable:$true] %s1052
          %1055 = dma.vmem_to_hbm [thread:$0]  %s1053, 512, %s1050, %s1020
        $region68: #{tpu_custom_call.1} parent=31 // pred_fallthru
          _
      $region32: #{tpu_custom_call.1} parent=5 // pred_fallthru
        _
      %p1056 = scmp.le.s32.totalorder 2, %s21
      // Predicated region
      $region69: #{tpu_custom_call.1} parent=5 // pred_check
        %p1057 = pneg %p1056
      $region70: #{tpu_custom_call.1} parent=5 // pred_check_branch
        %1059 = sbr.rel (%p1057) target = $region72
      $region71: #{tpu_custom_call.1} parent=5 // pred_region
        %s1060 = ssub.s32 %s21, 2
        // Predicated region
        $region73: #{tpu_custom_call.1} parent=71 // pred_check
          %p1061 = pneg %p153
        $region74: #{tpu_custom_call.1} parent=71 // pred_check_branch
          %1063 = sbr.rel (%p1061) target = $region76
        $region75: #{tpu_custom_call.1} parent=71 // pred_region
          %s1064 = sand.u32 %s138, 1
          %s1065 = scalar_lea.sflag [#allocation5], %s1064
          %s1066 = sand.u32 %s138, 1
          %s1067 = smul.addr %s1066, 32
          %s1068 = scalar_lea.vmem [#allocation9], %s1067
          %1069 = dma.done %s1065, 512
        $region76: #{tpu_custom_call.1} parent=71 // pred_fallthru
          _
        // Predicated region
        $region77: #{tpu_custom_call.1} parent=71 // pred_check
          %p1070 = pneg %p181
        $region78: #{tpu_custom_call.1} parent=71 // pred_check_branch
          %1072 = sbr.rel (%p1070) target = $region80
        $region79: #{tpu_custom_call.1} parent=71 // pred_region
          %s1073 = sand.u32 %s166, 1
          %s1074 = scalar_lea.sflag [#allocation11], %s1073
          %s1075 = sand.u32 %s166, 1
          %s1076 = smul.addr %s1075, 32
          %s1077 = scalar_lea.vmem [#allocation10], %s1076
          %1078 = dma.done %s1074, 512
        $region80: #{tpu_custom_call.1} parent=71 // pred_fallthru
          _
      $region72: #{tpu_custom_call.1} parent=5 // pred_fallthru
        _
    $region6: #{tpu_custom_call.1} parent=1 // loop_footer
      %s25 = sadd.s32 1, %s21
    $region7: #{tpu_custom_call.1} parent=1 // loop_footer_branch
      %20 = sbr.rel target = $region3
    $region8: #{tpu_custom_call.1} parent=1 // loop_exit
      _
    %1079 = vsyncpa [#allocation4], 1
    %s1080 = scalar_lea.sflag [#allocation4], 1
    %1081 = vsyncpa %s1080, 1
    %1082 = vsyncpa [#allocation7], 1
    %s1083 = scalar_lea.sflag [#allocation7], 1
    %1084 = vsyncpa %s1083, 1
    %1085 = vsyncpa [#allocation5], 1
    %s1086 = scalar_lea.sflag [#allocation5], 1
    %1087 = vsyncpa %s1086, 1
    %1088 = vsyncpa [#allocation11], 1
    %s1089 = scalar_lea.sflag [#allocation11], 1
    %1090 = vsyncpa %s1089, 1

</llo_original>
